<compile_context>
chip_gen: v6e
topology: v6e:2x2x1
jax: 0.10.0
libtpu: 0.0.40
codegen_flags: <defaults>
</compile_context>

<pallas_src>
import functools
import math

import jax
import jax.numpy as jnp
import numpy as np
from jax import lax
from jax.experimental import pallas as pl
from jax.experimental.pallas import tpu as pltpu


# ----------------------------------------------------------------------------- kernel
def pblstm_kernel(xf_ref, xb_ref,
                  wih_f_ref, whh_f_ref, bf_ref,
                  wih_b_ref, whh_b_ref, bb_ref,
                  outf_ref, outb_ref, hn_ref, cn_ref,
                  gf_s, gb_s, hf_s, cf_s, hb_s, cb_s):
    # xf_ref / xb_ref : (Tc, Bp, 2F)  forward-order / reverse-order time chunk
    # wih_*           : (2F, 4Hp)     whh_*: (Hp, 4Hp)   b_*: (1, 4Hp)
    # outf_ref/outb_ref: (Tc, Bp, Hp) per-direction output chunks
    # hn_ref / cn_ref : (2, Bp, Hp)   final states (resident output blocks)
    # gf_s / gb_s     : (Tc, Bp, 4Hp) precomputed input-projection gates
    # h*_s / c*_s     : (Bp, Hp)      recurrent carries, persist across chunks
    Tc, B, F2 = xf_ref.shape
    H = whh_f_ref.shape[0]

    @pl.when(pl.program_id(0) == 0)
    def _init_carry():
        hf_s[...] = jnp.zeros_like(hf_s)
        cf_s[...] = jnp.zeros_like(cf_s)
        hb_s[...] = jnp.zeros_like(hb_s)
        cb_s[...] = jnp.zeros_like(cb_s)

    # ---- Phase 1: hoisted input projection for the whole chunk (big GEMMs) ----
    xf = xf_ref[...].reshape(Tc * B, F2)
    xb = xb_ref[...].reshape(Tc * B, F2)
    gf_s[...] = (jnp.dot(xf, wih_f_ref[...], preferred_element_type=jnp.float32)
                 + bf_ref[...]).reshape(Tc, B, 4 * H)
    gb_s[...] = (jnp.dot(xb, wih_b_ref[...], preferred_element_type=jnp.float32)
                 + bb_ref[...]).reshape(Tc, B, 4 * H)

    whh_f = whh_f_ref[...]
    whh_b = whh_b_ref[...]

    def gates_to_hc(g, c_prev):
        # PyTorch gate order: i, f, g, o
        i = jax.nn.sigmoid(g[:, 0 * H:1 * H])
        f = jax.nn.sigmoid(g[:, 1 * H:2 * H])
        gg = jnp.tanh(g[:, 2 * H:3 * H])
        o = jax.nn.sigmoid(g[:, 3 * H:4 * H])
        c_new = f * c_prev + i * gg
        h_new = o * jnp.tanh(c_new)
        return h_new, c_new

    # ---- Phase 2: interleaved fwd/bwd recurrence over the chunk ----
    def step(t, carry):
        h_f, c_f, h_b, c_b = carry
        tb = Tc - 1 - t
        gf = gf_s[t] + jnp.dot(h_f, whh_f, preferred_element_type=jnp.float32)
        gb = gb_s[tb] + jnp.dot(h_b, whh_b, preferred_element_type=jnp.float32)
        h_f, c_f = gates_to_hc(gf, c_f)
        h_b, c_b = gates_to_hc(gb, c_b)
        outf_ref[t] = h_f.astype(outf_ref.dtype)
        outb_ref[tb] = h_b.astype(outb_ref.dtype)
        return h_f, c_f, h_b, c_b

    h_f, c_f, h_b, c_b = lax.fori_loop(
        0, Tc, step,
        (hf_s[...], cf_s[...], hb_s[...], cb_s[...]),
        unroll=2)

    # persist carries for the next chunk
    hf_s[...] = h_f
    cf_s[...] = c_f
    hb_s[...] = h_b
    cb_s[...] = c_b

    # final states: resident output block, last chunk's value is written back
    hn_ref[0] = h_f.astype(hn_ref.dtype)
    hn_ref[1] = h_b.astype(hn_ref.dtype)
    cn_ref[0] = c_f.astype(cn_ref.dtype)
    cn_ref[1] = c_b.astype(cn_ref.dtype)


# ----------------------------------------------------------------------------- wrapper
def _round_up(x, m):
    return (x + m - 1) // m * m


def _pick_time_chunk(T2, Bp, F2, Hp, budget_bytes=4 << 20):
    # fp32 bytes per timestep resident in VMEM:
    #   x chunks (2 dirs, double buffered) + gate scratch (2 dirs)
    #   + output chunks (2 dirs, double buffered)
    per_t = 4 * Bp * (2 * 2 * F2 + 2 * 4 * Hp + 2 * 2 * Hp)
    tc = int(max(1, min(T2, budget_bytes // per_t)))
    while T2 % tc:
        tc -= 1
    return tc


def _pad_params(params, H, Hp):
    if Hp == H:
        return dict(params)

    def pad_cols(a):  # (..., 4H) -> (..., 4Hp), per-gate zero pad
        a4 = a.reshape(a.shape[:-1] + (4, H))
        a4 = jnp.pad(a4, [(0, 0)] * (a4.ndim - 1) + [(0, Hp - H)])
        return a4.reshape(a.shape[:-1] + (4 * Hp,))

    out = {}
    for tag in ("f", "b"):
        out[f"w_ih_{tag}"] = pad_cols(params[f"w_ih_{tag}"])
        whh = jnp.pad(params[f"w_hh_{tag}"], ((0, Hp - H), (0, 0)))
        out[f"w_hh_{tag}"] = pad_cols(whh)
        out[f"b_{tag}"] = pad_cols(params[f"b_{tag}"])
    return out


def pblstm_forward(x, params, *, time_chunk=None):
    """x: (B, T, F) batch_first, T even. Returns (output, (h_n, c_n))."""
    B, T, F = x.shape
    assert T % 2 == 0, "pBLSTM requires an even number of timesteps"
    T2 = T // 2
    F2 = 2 * F
    H = params["w_hh_f"].shape[0]

    Bp = _round_up(B, 8)           # sublane multiple
    Hp = _round_up(H, 32)          # so 4*Hp is a 128-lane multiple
    Tc = time_chunk if time_chunk is not None else _pick_time_chunk(T2, Bp, F2, Hp)
    assert T2 % Tc == 0, "time_chunk must divide T//2"
    nc = T2 // Tc

    # pyramid reshape + time-major layout + batch padding (glue only)
    x2 = x.reshape(B, T2, F2)
    x_tm = jnp.transpose(x2, (1, 0, 2)).astype(jnp.float32)
    if Bp != B:
        x_tm = jnp.pad(x_tm, ((0, 0), (0, Bp - B), (0, 0)))

    p = _pad_params(params, H, Hp)
    f32 = jnp.float32

    def full(shape):
        return pl.BlockSpec(shape, lambda c, _s=len(shape): (0,) * _s)

    in_specs = [
        pl.BlockSpec((Tc, Bp, F2), lambda c: (c, 0, 0)),             # x, fwd order
        pl.BlockSpec((Tc, Bp, F2), lambda c: (nc - 1 - c, 0, 0)),    # x, bwd order
        full((F2, 4 * Hp)), full((Hp, 4 * Hp)), full((1, 4 * Hp)),   # fwd weights
        full((F2, 4 * Hp)), full((Hp, 4 * Hp)), full((1, 4 * Hp)),   # bwd weights
    ]
    out_specs = (
        pl.BlockSpec((Tc, Bp, Hp), lambda c: (c, 0, 0)),             # fwd outputs
        pl.BlockSpec((Tc, Bp, Hp), lambda c: (nc - 1 - c, 0, 0)),    # bwd outputs
        full((2, Bp, Hp)),                                           # h_n
        full((2, Bp, Hp)),                                           # c_n
    )
    out_shape = (
        jax.ShapeDtypeStruct((T2, Bp, Hp), f32),
        jax.ShapeDtypeStruct((T2, Bp, Hp), f32),
        jax.ShapeDtypeStruct((2, Bp, Hp), f32),
        jax.ShapeDtypeStruct((2, Bp, Hp), f32),
    )
    scratch_shapes = [
        pltpu.VMEM((Tc, Bp, 4 * Hp), f32),   # fwd gates chunk
        pltpu.VMEM((Tc, Bp, 4 * Hp), f32),   # bwd gates chunk
        pltpu.VMEM((Bp, Hp), f32),           # h_f carry
        pltpu.VMEM((Bp, Hp), f32),           # c_f carry
        pltpu.VMEM((Bp, Hp), f32),           # h_b carry
        pltpu.VMEM((Bp, Hp), f32),           # c_b carry
    ]

    out_f, out_b, hn_p, cn_p = pl.pallas_call(
        pblstm_kernel,
        out_shape=out_shape,
        grid=(nc,),
        in_specs=in_specs,
        out_specs=out_specs,
        scratch_shapes=scratch_shapes,
        compiler_params=pltpu.CompilerParams(
            dimension_semantics=("arbitrary",)),
    )(x_tm, x_tm,
      p["w_ih_f"], p["w_hh_f"], p["b_f"],
      p["w_ih_b"], p["w_hh_b"], p["b_b"])

    # strip padding, concat directions, back to batch_first
    out_f = out_f[:, :B, :H]
    out_b = out_b[:, :B, :H]
    output = jnp.transpose(jnp.concatenate([out_f, out_b], axis=-1), (1, 0, 2))
    h_n = hn_p[:, :B, :H]
    c_n = cn_p[:, :B, :H]
    return output, (h_n, c_n)


# ----------------------------------------------------------------------------- params
def init_params(key, input_feature_dim, hidden_dim):
    """Deterministic params matching nn.LSTM(2F, H, bidirectional=True) shapes."""
    in_dim = 2 * input_feature_dim
    H = hidden_dim
    k = 1.0 / math.sqrt(H)
    keys = jax.random.split(key, 8)

    def u(kk, shape):
        return jax.random.uniform(kk, shape, jnp.float32, minval=-k, maxval=k)

    params = {}
    for d, tag in enumerate(["f", "b"]):  # forward / reverse directions
        w_ih = u(keys[4 * d + 0], (4 * H, in_dim))   # torch: weight_ih_l0[(_reverse)]
        w_hh = u(keys[4 * d + 1], (4 * H, H))        # torch: weight_hh_l0[(_reverse)]
        b_ih = u(keys[4 * d + 2], (4 * H,))
        b_hh = u(keys[4 * d + 3], (4 * H,))
        params[f"w_ih_{tag}"] = jnp.asarray(w_ih.T)            # (2F, 4H)
        params[f"w_hh_{tag}"] = jnp.asarray(w_hh.T)            # (H, 4H)
        params[f"b_{tag}"] = (b_ih + b_hh).reshape(1, 4 * H)   # fused bias
    return params


# ----------------------------------------------------------------------------- reference
def _reference(x2, params, H):
    """Pure-JAX reference BLSTM (correctness checking only)."""
    B, T2, _ = x2.shape

    def run_dir(wih, whh, b, reverse):
        h = jnp.zeros((B, H), jnp.float32)
        c = jnp.zeros((B, H), jnp.float32)
        seq = x2[:, ::-1, :] if reverse else x2
        outs = []
        for t in range(T2):
            gates = seq[:, t, :] @ wih + h @ whh + b
            i = jax.nn.sigmoid(gates[:, :H])
            f = jax.nn.sigmoid(gates[:, H:2 * H])
            g = jnp.tanh(gates[:, 2 * H:3 * H])
            o = jax.nn.sigmoid(gates[:, 3 * H:])
            c = f * c + i * g
            h = o * jnp.tanh(c)
            outs.append(h)
        out = jnp.stack(outs, axis=1)
        if reverse:
            out = out[:, ::-1, :]
        return out, h, c

    of, hf, cf = run_dir(params["w_ih_f"], params["w_hh_f"], params["b_f"], False)
    ob, hb, cb = run_dir(params["w_ih_b"], params["w_hh_b"], params["b_b"], True)
    return (jnp.concatenate([of, ob], axis=-1),
            (jnp.stack([hf, hb]), jnp.stack([cf, cb])))


# ----------------------------------------------------------------------------- demo
if __name__ == "__main__":
    # small shapes consistent with the module's forward
    B, T, F, H = 2, 8, 16, 32
    key = jax.random.PRNGKey(0)
    kx, kp = jax.random.split(key)
    x = jax.random.normal(kx, (B, T, F), dtype=jnp.float32)
    params = init_params(kp, F, H)

    # time_chunk=2 -> 2 grid steps, exercises the chunked carry path
    fwd = jax.jit(functools.partial(pblstm_forward, time_chunk=2))
    output, (h_n, c_n) = fwd(x, params)
    jax.block_until_ready((output, h_n, c_n))

    # sanity check against a pure-JAX reference
    out_r, (hn_r, cn_r) = _reference(x.reshape(B, T // 2, 2 * F), params, H)
    assert output.shape == (B, T // 2, 2 * H)
    assert h_n.shape == (2, B, H) and c_n.shape == (2, B, H)
    assert np.allclose(np.asarray(output), np.asarray(out_r), atol=1e-4, rtol=1e-4)
    assert np.allclose(np.asarray(h_n), np.asarray(hn_r), atol=1e-4, rtol=1e-4)
    assert np.allclose(np.asarray(c_n), np.asarray(cn_r), atol=1e-4, rtol=1e-4)

    print("KERNEL_OK")
</pallas_src>

<mosaic_0001>
module attributes {stable_mosaic.version = 11 : i64} {
  func.func @pblstm_kernel(%arg0: i32, %arg1: memref<2x8x32xf32, #tpu.memory_space<vmem>>, %arg2: memref<2x8x32xf32, #tpu.memory_space<vmem>>, %arg3: memref<32x128xf32, #tpu.memory_space<vmem>>, %arg4: memref<32x128xf32, #tpu.memory_space<vmem>>, %arg5: memref<1x128xf32, #tpu.memory_space<vmem>>, %arg6: memref<32x128xf32, #tpu.memory_space<vmem>>, %arg7: memref<32x128xf32, #tpu.memory_space<vmem>>, %arg8: memref<1x128xf32, #tpu.memory_space<vmem>>, %arg9: memref<2x8x32xf32, #tpu.memory_space<vmem>>, %arg10: memref<2x8x32xf32, #tpu.memory_space<vmem>>, %arg11: memref<2x8x32xf32, #tpu.memory_space<vmem>>, %arg12: memref<2x8x32xf32, #tpu.memory_space<vmem>>, %arg13: memref<2x8x128xf32, #tpu.memory_space<vmem>>, %arg14: memref<2x8x128xf32, #tpu.memory_space<vmem>>, %arg15: memref<8x32xf32, #tpu.memory_space<vmem>>, %arg16: memref<8x32xf32, #tpu.memory_space<vmem>>, %arg17: memref<8x32xf32, #tpu.memory_space<vmem>>, %arg18: memref<8x32xf32, #tpu.memory_space<vmem>>) attributes {dimension_semantics = [#tpu.dimension_semantics<arbitrary>], iteration_bounds = array<i64: 2>, scalar_prefetch = 0 : i64, scratch_operands = 6 : i64, tpu.core_type = #tpu.core_type<tc>, window_params = [{transform_indices = @transform_0, window_bounds = array<i64: 2, 8, 32>}, {transform_indices = @transform_1, window_bounds = array<i64: 2, 8, 32>}, {pipeline_mode = #tpu.pipeline_mode<synchronous>, transform_indices = @transform_2, window_bounds = array<i64: 32, 128>}, {pipeline_mode = #tpu.pipeline_mode<synchronous>, transform_indices = @transform_3, window_bounds = array<i64: 32, 128>}, {pipeline_mode = #tpu.pipeline_mode<synchronous>, transform_indices = @transform_4, window_bounds = array<i64: 1, 128>}, {pipeline_mode = #tpu.pipeline_mode<synchronous>, transform_indices = @transform_5, window_bounds = array<i64: 32, 128>}, {pipeline_mode = #tpu.pipeline_mode<synchronous>, transform_indices = @transform_6, window_bounds = array<i64: 32, 128>}, {pipeline_mode = #tpu.pipeline_mode<synchronous>, transform_indices = @transform_7, window_bounds = array<i64: 1, 128>}, {transform_indices = @transform_8, window_bounds = array<i64: 2, 8, 32>}, {transform_indices = @transform_9, window_bounds = array<i64: 2, 8, 32>}, {pipeline_mode = #tpu.pipeline_mode<synchronous>, transform_indices = @transform_10, window_bounds = array<i64: 2, 8, 32>}, {pipeline_mode = #tpu.pipeline_mode<synchronous>, transform_indices = @transform_11, window_bounds = array<i64: 2, 8, 32>}]} {
    %c0_i32 = arith.constant 0 : i32
    %0 = arith.cmpi eq, %arg0, %c0_i32 : i32
    %1 = arith.extui %0 : i1 to i32
    %c0_i32_0 = arith.constant 0 : i32
    %2 = arith.cmpi ne, %1, %c0_i32_0 : i32
    scf.if %2 {
      %cst_87 = arith.constant 0.000000e+00 : f32
      %181 = vector.broadcast %cst_87 : f32 to vector<8x32xf32>
      %c0_88 = arith.constant 0 : index
      %c0_89 = arith.constant 0 : index
      %182 = vector.load %arg15[%c0_88, %c0_89] : memref<8x32xf32, #tpu.memory_space<vmem>>, vector<8x32xf32>
      tpu.vector_store %arg15[%c0_88, %c0_89], %181 {strides = array<i32>} : memref<8x32xf32, #tpu.memory_space<vmem>>, vector<8x32xf32>,
      %cst_90 = arith.constant 0.000000e+00 : f32
      %183 = vector.broadcast %cst_90 : f32 to vector<8x32xf32>
      %c0_91 = arith.constant 0 : index
      %c0_92 = arith.constant 0 : index
      %184 = vector.load %arg16[%c0_91, %c0_92] : memref<8x32xf32, #tpu.memory_space<vmem>>, vector<8x32xf32>
      tpu.vector_store %arg16[%c0_91, %c0_92], %183 {strides = array<i32>} : memref<8x32xf32, #tpu.memory_space<vmem>>, vector<8x32xf32>,
      %cst_93 = arith.constant 0.000000e+00 : f32
      %185 = vector.broadcast %cst_93 : f32 to vector<8x32xf32>
      %c0_94 = arith.constant 0 : index
      %c0_95 = arith.constant 0 : index
      %186 = vector.load %arg17[%c0_94, %c0_95] : memref<8x32xf32, #tpu.memory_space<vmem>>, vector<8x32xf32>
      tpu.vector_store %arg17[%c0_94, %c0_95], %185 {strides = array<i32>} : memref<8x32xf32, #tpu.memory_space<vmem>>, vector<8x32xf32>,
      %cst_96 = arith.constant 0.000000e+00 : f32
      %187 = vector.broadcast %cst_96 : f32 to vector<8x32xf32>
      %c0_97 = arith.constant 0 : index
      %c0_98 = arith.constant 0 : index
      %188 = vector.load %arg18[%c0_97, %c0_98] : memref<8x32xf32, #tpu.memory_space<vmem>>, vector<8x32xf32>
      tpu.vector_store %arg18[%c0_97, %c0_98], %187 {strides = array<i32>} : memref<8x32xf32, #tpu.memory_space<vmem>>, vector<8x32xf32>,
    } else {
    }
    %c0 = arith.constant 0 : index
    %c0_1 = arith.constant 0 : index
    %c0_2 = arith.constant 0 : index
    %3 = vector.load %arg1[%c0, %c0_1, %c0_2] : memref<2x8x32xf32, #tpu.memory_space<vmem>>, vector<2x8x32xf32>
    %4 = vector.shape_cast %3 : vector<2x8x32xf32> to vector<16x32xf32>
    %c0_3 = arith.constant 0 : index
    %c0_4 = arith.constant 0 : index
    %c0_5 = arith.constant 0 : index
    %5 = vector.load %arg2[%c0_3, %c0_4, %c0_5] : memref<2x8x32xf32, #tpu.memory_space<vmem>>, vector<2x8x32xf32>
    %6 = vector.shape_cast %5 : vector<2x8x32xf32> to vector<16x32xf32>
    %c0_6 = arith.constant 0 : index
    %c0_7 = arith.constant 0 : index
    %7 = vector.load %arg3[%c0_6, %c0_7] : memref<32x128xf32, #tpu.memory_space<vmem>>, vector<32x128xf32>
    %cst = arith.constant dense<0.000000e+00> : vector<16x128xf32>
    %8 = tpu.matmul %4, %7, %cst {dimension_numbers = #tpu.dot_dimension_numbers<[1], [0], [0], [1], [0, 0, 1, 1], [], []>} : vector<16x32xf32>, vector<32x128xf32>, vector<16x128xf32> -> vector<16x128xf32>
    %c0_8 = arith.constant 0 : index
    %c0_9 = arith.constant 0 : index
    %9 = vector.load %arg5[%c0_8, %c0_9] : memref<1x128xf32, #tpu.memory_space<vmem>>, vector<1x128xf32>
    %10 = vector.broadcast %9 : vector<1x128xf32> to vector<16x128xf32>
    %11 = arith.addf %8, %10 : vector<16x128xf32>
    %12 = vector.shape_cast %11 : vector<16x128xf32> to vector<2x8x128xf32>
    %c0_10 = arith.constant 0 : index
    %c0_11 = arith.constant 0 : index
    %c0_12 = arith.constant 0 : index
    %13 = vector.load %arg13[%c0_10, %c0_11, %c0_12] : memref<2x8x128xf32, #tpu.memory_space<vmem>>, vector<2x8x128xf32>
    tpu.vector_store %arg13[%c0_10, %c0_11, %c0_12], %12 {strides = array<i32>} : memref<2x8x128xf32, #tpu.memory_space<vmem>>, vector<2x8x128xf32>,
    %c0_13 = arith.constant 0 : index
    %c0_14 = arith.constant 0 : index
    %14 = vector.load %arg6[%c0_13, %c0_14] : memref<32x128xf32, #tpu.memory_space<vmem>>, vector<32x128xf32>
    %cst_15 = arith.constant dense<0.000000e+00> : vector<16x128xf32>
    %15 = tpu.matmul %6, %14, %cst_15 {dimension_numbers = #tpu.dot_dimension_numbers<[1], [0], [0], [1], [0, 0, 1, 1], [], []>} : vector<16x32xf32>, vector<32x128xf32>, vector<16x128xf32> -> vector<16x128xf32>
    %c0_16 = arith.constant 0 : index
    %c0_17 = arith.constant 0 : index
    %16 = vector.load %arg8[%c0_16, %c0_17] : memref<1x128xf32, #tpu.memory_space<vmem>>, vector<1x128xf32>
    %17 = vector.broadcast %16 : vector<1x128xf32> to vector<16x128xf32>
    %18 = arith.addf %15, %17 : vector<16x128xf32>
    %19 = vector.shape_cast %18 : vector<16x128xf32> to vector<2x8x128xf32>
    %c0_18 = arith.constant 0 : index
    %c0_19 = arith.constant 0 : index
    %c0_20 = arith.constant 0 : index
    %20 = vector.load %arg14[%c0_18, %c0_19, %c0_20] : memref<2x8x128xf32, #tpu.memory_space<vmem>>, vector<2x8x128xf32>
    tpu.vector_store %arg14[%c0_18, %c0_19, %c0_20], %19 {strides = array<i32>} : memref<2x8x128xf32, #tpu.memory_space<vmem>>, vector<2x8x128xf32>,
    %c0_21 = arith.constant 0 : index
    %c0_22 = arith.constant 0 : index
    %21 = vector.load %arg4[%c0_21, %c0_22] : memref<32x128xf32, #tpu.memory_space<vmem>>, vector<32x128xf32>
    %c0_23 = arith.constant 0 : index
    %c0_24 = arith.constant 0 : index
    %22 = vector.load %arg7[%c0_23, %c0_24] : memref<32x128xf32, #tpu.memory_space<vmem>>, vector<32x128xf32>
    %c0_25 = arith.constant 0 : index
    %c0_26 = arith.constant 0 : index
    %23 = vector.load %arg15[%c0_25, %c0_26] : memref<8x32xf32, #tpu.memory_space<vmem>>, vector<8x32xf32>
    %c0_27 = arith.constant 0 : index
    %c0_28 = arith.constant 0 : index
    %24 = vector.load %arg16[%c0_27, %c0_28] : memref<8x32xf32, #tpu.memory_space<vmem>>, vector<8x32xf32>
    %c0_29 = arith.constant 0 : index
    %c0_30 = arith.constant 0 : index
    %25 = vector.load %arg17[%c0_29, %c0_30] : memref<8x32xf32, #tpu.memory_space<vmem>>, vector<8x32xf32>
    %c0_31 = arith.constant 0 : index
    %c0_32 = arith.constant 0 : index
    %26 = vector.load %arg18[%c0_31, %c0_32] : memref<8x32xf32, #tpu.memory_space<vmem>>, vector<8x32xf32>
    %c0_i32_33 = arith.constant 0 : i32
    %c1_i32 = arith.constant 1 : i32
    %27 = arith.subi %c1_i32, %c0_i32_33 : i32
    %28 = arith.index_cast %c0_i32_33 : i32 to index
    %c0_34 = arith.constant 0 : index
    %c0_35 = arith.constant 0 : index
    %29 = vector.load %arg13[%28, %c0_34, %c0_35] : memref<2x8x128xf32, #tpu.memory_space<vmem>>, vector<1x8x128xf32>
    %30 = vector.shape_cast %29 : vector<1x8x128xf32> to vector<8x128xf32>
    %cst_36 = arith.constant dense<0.000000e+00> : vector<8x128xf32>
    %31 = tpu.matmul %23, %21, %cst_36 {dimension_numbers = #tpu.dot_dimension_numbers<[1], [0], [0], [1], [0, 0, 1, 1], [], []>} : vector<8x32xf32>, vector<32x128xf32>, vector<8x128xf32> -> vector<8x128xf32>
    %32 = arith.addf %30, %31 : vector<8x128xf32>
    %33 = arith.index_cast %27 : i32 to index
    %c0_37 = arith.constant 0 : index
    %c0_38 = arith.constant 0 : index
    %34 = vector.load %arg14[%33, %c0_37, %c0_38] : memref<2x8x128xf32, #tpu.memory_space<vmem>>, vector<1x8x128xf32>
    %35 = vector.shape_cast %34 : vector<1x8x128xf32> to vector<8x128xf32>
    %cst_39 = arith.constant dense<0.000000e+00> : vector<8x128xf32>
    %36 = tpu.matmul %25, %22, %cst_39 {dimension_numbers = #tpu.dot_dimension_numbers<[1], [0], [0], [1], [0, 0, 1, 1], [], []>} : vector<8x32xf32>, vector<32x128xf32>, vector<8x128xf32> -> vector<8x128xf32>
    %37 = arith.addf %35, %36 : vector<8x128xf32>
    %38 = vector.extract_strided_slice %32 {offsets = [0, 0], sizes = [8, 32], strides = [1, 1]} : vector<8x128xf32> to vector<8x32xf32>
    %39 = arith.negf %38 : vector<8x32xf32>
    %40 = math.exp %39 : vector<8x32xf32>
    %cst_40 = arith.constant 1.000000e+00 : f32
    %41 = vector.broadcast %cst_40 : f32 to vector<8x32xf32>
    %42 = arith.addf %41, %40 : vector<8x32xf32>
    %43 = arith.divf %41, %42 : vector<8x32xf32>
    %44 = vector.extract_strided_slice %32 {offsets = [0, 32], sizes = [8, 32], strides = [1, 1]} : vector<8x128xf32> to vector<8x32xf32>
    %45 = arith.negf %44 : vector<8x32xf32>
    %46 = math.exp %45 : vector<8x32xf32>
    %cst_41 = arith.constant 1.000000e+00 : f32
    %47 = vector.broadcast %cst_41 : f32 to vector<8x32xf32>
    %48 = arith.addf %47, %46 : vector<8x32xf32>
    %49 = arith.divf %47, %48 : vector<8x32xf32>
    %50 = vector.extract_strided_slice %32 {offsets = [0, 64], sizes = [8, 32], strides = [1, 1]} : vector<8x128xf32> to vector<8x32xf32>
    %51 = math.tanh %50 : vector<8x32xf32>
    %52 = vector.extract_strided_slice %32 {offsets = [0, 96], sizes = [8, 32], strides = [1, 1]} : vector<8x128xf32> to vector<8x32xf32>
    %53 = arith.negf %52 : vector<8x32xf32>
    %54 = math.exp %53 : vector<8x32xf32>
    %cst_42 = arith.constant 1.000000e+00 : f32
    %55 = vector.broadcast %cst_42 : f32 to vector<8x32xf32>
    %56 = arith.addf %55, %54 : vector<8x32xf32>
    %57 = arith.divf %55, %56 : vector<8x32xf32>
    %58 = arith.mulf %49, %24 : vector<8x32xf32>
    %59 = arith.mulf %43, %51 : vector<8x32xf32>
    %60 = arith.addf %58, %59 : vector<8x32xf32>
    %61 = math.tanh %60 : vector<8x32xf32>
    %62 = arith.mulf %57, %61 : vector<8x32xf32>
    %63 = vector.extract_strided_slice %37 {offsets = [0, 0], sizes = [8, 32], strides = [1, 1]} : vector<8x128xf32> to vector<8x32xf32>
    %64 = arith.negf %63 : vector<8x32xf32>
    %65 = math.exp %64 : vector<8x32xf32>
    %cst_43 = arith.constant 1.000000e+00 : f32
    %66 = vector.broadcast %cst_43 : f32 to vector<8x32xf32>
    %67 = arith.addf %66, %65 : vector<8x32xf32>
    %68 = arith.divf %66, %67 : vector<8x32xf32>
    %69 = vector.extract_strided_slice %37 {offsets = [0, 32], sizes = [8, 32], strides = [1, 1]} : vector<8x128xf32> to vector<8x32xf32>
    %70 = arith.negf %69 : vector<8x32xf32>
    %71 = math.exp %70 : vector<8x32xf32>
    %cst_44 = arith.constant 1.000000e+00 : f32
    %72 = vector.broadcast %cst_44 : f32 to vector<8x32xf32>
    %73 = arith.addf %72, %71 : vector<8x32xf32>
    %74 = arith.divf %72, %73 : vector<8x32xf32>
    %75 = vector.extract_strided_slice %37 {offsets = [0, 64], sizes = [8, 32], strides = [1, 1]} : vector<8x128xf32> to vector<8x32xf32>
    %76 = math.tanh %75 : vector<8x32xf32>
    %77 = vector.extract_strided_slice %37 {offsets = [0, 96], sizes = [8, 32], strides = [1, 1]} : vector<8x128xf32> to vector<8x32xf32>
    %78 = arith.negf %77 : vector<8x32xf32>
    %79 = math.exp %78 : vector<8x32xf32>
    %cst_45 = arith.constant 1.000000e+00 : f32
    %80 = vector.broadcast %cst_45 : f32 to vector<8x32xf32>
    %81 = arith.addf %80, %79 : vector<8x32xf32>
    %82 = arith.divf %80, %81 : vector<8x32xf32>
    %83 = arith.mulf %74, %26 : vector<8x32xf32>
    %84 = arith.mulf %68, %76 : vector<8x32xf32>
    %85 = arith.addf %83, %84 : vector<8x32xf32>
    %86 = math.tanh %85 : vector<8x32xf32>
    %87 = arith.mulf %82, %86 : vector<8x32xf32>
    %88 = arith.index_cast %c0_i32_33 : i32 to index
    %c0_46 = arith.constant 0 : index
    %c0_47 = arith.constant 0 : index
    %89 = vector.load %arg9[%88, %c0_46, %c0_47] : memref<2x8x32xf32, #tpu.memory_space<vmem>>, vector<1x8x32xf32>
    %90 = vector.shape_cast %89 : vector<1x8x32xf32> to vector<8x32xf32>
    %91 = vector.shape_cast %62 : vector<8x32xf32> to vector<1x8x32xf32>
    tpu.vector_store %arg9[%88, %c0_46, %c0_47], %91 {strides = array<i32>} : memref<2x8x32xf32, #tpu.memory_space<vmem>>, vector<1x8x32xf32>,
    %92 = arith.index_cast %27 : i32 to index
    %c0_48 = arith.constant 0 : index
    %c0_49 = arith.constant 0 : index
    %93 = vector.load %arg10[%92, %c0_48, %c0_49] : memref<2x8x32xf32, #tpu.memory_space<vmem>>, vector<1x8x32xf32>
    %94 = vector.shape_cast %93 : vector<1x8x32xf32> to vector<8x32xf32>
    %95 = vector.shape_cast %87 : vector<8x32xf32> to vector<1x8x32xf32>
    tpu.vector_store %arg10[%92, %c0_48, %c0_49], %95 {strides = array<i32>} : memref<2x8x32xf32, #tpu.memory_space<vmem>>, vector<1x8x32xf32>,
    %c1_i32_50 = arith.constant 1 : i32
    %c1_i32_51 = arith.constant 1 : i32
    %96 = arith.subi %c1_i32_51, %c1_i32_50 : i32
    %97 = arith.index_cast %c1_i32_50 : i32 to index
    %c0_52 = arith.constant 0 : index
    %c0_53 = arith.constant 0 : index
    %98 = vector.load %arg13[%97, %c0_52, %c0_53] : memref<2x8x128xf32, #tpu.memory_space<vmem>>, vector<1x8x128xf32>
    %99 = vector.shape_cast %98 : vector<1x8x128xf32> to vector<8x128xf32>
    %cst_54 = arith.constant dense<0.000000e+00> : vector<8x128xf32>
    %100 = tpu.matmul %62, %21, %cst_54 {dimension_numbers = #tpu.dot_dimension_numbers<[1], [0], [0], [1], [0, 0, 1, 1], [], []>} : vector<8x32xf32>, vector<32x128xf32>, vector<8x128xf32> -> vector<8x128xf32>
    %101 = arith.addf %99, %100 : vector<8x128xf32>
    %102 = arith.index_cast %96 : i32 to index
    %c0_55 = arith.constant 0 : index
    %c0_56 = arith.constant 0 : index
    %103 = vector.load %arg14[%102, %c0_55, %c0_56] : memref<2x8x128xf32, #tpu.memory_space<vmem>>, vector<1x8x128xf32>
    %104 = vector.shape_cast %103 : vector<1x8x128xf32> to vector<8x128xf32>
    %cst_57 = arith.constant dense<0.000000e+00> : vector<8x128xf32>
    %105 = tpu.matmul %87, %22, %cst_57 {dimension_numbers = #tpu.dot_dimension_numbers<[1], [0], [0], [1], [0, 0, 1, 1], [], []>} : vector<8x32xf32>, vector<32x128xf32>, vector<8x128xf32> -> vector<8x128xf32>
    %106 = arith.addf %104, %105 : vector<8x128xf32>
    %107 = vector.extract_strided_slice %101 {offsets = [0, 0], sizes = [8, 32], strides = [1, 1]} : vector<8x128xf32> to vector<8x32xf32>
    %108 = arith.negf %107 : vector<8x32xf32>
    %109 = math.exp %108 : vector<8x32xf32>
    %cst_58 = arith.constant 1.000000e+00 : f32
    %110 = vector.broadcast %cst_58 : f32 to vector<8x32xf32>
    %111 = arith.addf %110, %109 : vector<8x32xf32>
    %112 = arith.divf %110, %111 : vector<8x32xf32>
    %113 = vector.extract_strided_slice %101 {offsets = [0, 32], sizes = [8, 32], strides = [1, 1]} : vector<8x128xf32> to vector<8x32xf32>
    %114 = arith.negf %113 : vector<8x32xf32>
    %115 = math.exp %114 : vector<8x32xf32>
    %cst_59 = arith.constant 1.000000e+00 : f32
    %116 = vector.broadcast %cst_59 : f32 to vector<8x32xf32>
    %117 = arith.addf %116, %115 : vector<8x32xf32>
    %118 = arith.divf %116, %117 : vector<8x32xf32>
    %119 = vector.extract_strided_slice %101 {offsets = [0, 64], sizes = [8, 32], strides = [1, 1]} : vector<8x128xf32> to vector<8x32xf32>
    %120 = math.tanh %119 : vector<8x32xf32>
    %121 = vector.extract_strided_slice %101 {offsets = [0, 96], sizes = [8, 32], strides = [1, 1]} : vector<8x128xf32> to vector<8x32xf32>
    %122 = arith.negf %121 : vector<8x32xf32>
    %123 = math.exp %122 : vector<8x32xf32>
    %cst_60 = arith.constant 1.000000e+00 : f32
    %124 = vector.broadcast %cst_60 : f32 to vector<8x32xf32>
    %125 = arith.addf %124, %123 : vector<8x32xf32>
    %126 = arith.divf %124, %125 : vector<8x32xf32>
    %127 = arith.mulf %118, %60 : vector<8x32xf32>
    %128 = arith.mulf %112, %120 : vector<8x32xf32>
    %129 = arith.addf %127, %128 : vector<8x32xf32>
    %130 = math.tanh %129 : vector<8x32xf32>
    %131 = arith.mulf %126, %130 : vector<8x32xf32>
    %132 = vector.extract_strided_slice %106 {offsets = [0, 0], sizes = [8, 32], strides = [1, 1]} : vector<8x128xf32> to vector<8x32xf32>
    %133 = arith.negf %132 : vector<8x32xf32>
    %134 = math.exp %133 : vector<8x32xf32>
    %cst_61 = arith.constant 1.000000e+00 : f32
    %135 = vector.broadcast %cst_61 : f32 to vector<8x32xf32>
    %136 = arith.addf %135, %134 : vector<8x32xf32>
    %137 = arith.divf %135, %136 : vector<8x32xf32>
    %138 = vector.extract_strided_slice %106 {offsets = [0, 32], sizes = [8, 32], strides = [1, 1]} : vector<8x128xf32> to vector<8x32xf32>
    %139 = arith.negf %138 : vector<8x32xf32>
    %140 = math.exp %139 : vector<8x32xf32>
    %cst_62 = arith.constant 1.000000e+00 : f32
    %141 = vector.broadcast %cst_62 : f32 to vector<8x32xf32>
    %142 = arith.addf %141, %140 : vector<8x32xf32>
    %143 = arith.divf %141, %142 : vector<8x32xf32>
    %144 = vector.extract_strided_slice %106 {offsets = [0, 64], sizes = [8, 32], strides = [1, 1]} : vector<8x128xf32> to vector<8x32xf32>
    %145 = math.tanh %144 : vector<8x32xf32>
    %146 = vector.extract_strided_slice %106 {offsets = [0, 96], sizes = [8, 32], strides = [1, 1]} : vector<8x128xf32> to vector<8x32xf32>
    %147 = arith.negf %146 : vector<8x32xf32>
    %148 = math.exp %147 : vector<8x32xf32>
    %cst_63 = arith.constant 1.000000e+00 : f32
    %149 = vector.broadcast %cst_63 : f32 to vector<8x32xf32>
    %150 = arith.addf %149, %148 : vector<8x32xf32>
    %151 = arith.divf %149, %150 : vector<8x32xf32>
    %152 = arith.mulf %143, %85 : vector<8x32xf32>
    %153 = arith.mulf %137, %145 : vector<8x32xf32>
    %154 = arith.addf %152, %153 : vector<8x32xf32>
    %155 = math.tanh %154 : vector<8x32xf32>
    %156 = arith.mulf %151, %155 : vector<8x32xf32>
    %157 = arith.index_cast %c1_i32_50 : i32 to index
    %c0_64 = arith.constant 0 : index
    %c0_65 = arith.constant 0 : index
    %158 = vector.load %arg9[%157, %c0_64, %c0_65] : memref<2x8x32xf32, #tpu.memory_space<vmem>>, vector<1x8x32xf32>
    %159 = vector.shape_cast %158 : vector<1x8x32xf32> to vector<8x32xf32>
    %160 = vector.shape_cast %131 : vector<8x32xf32> to vector<1x8x32xf32>
    tpu.vector_store %arg9[%157, %c0_64, %c0_65], %160 {strides = array<i32>} : memref<2x8x32xf32, #tpu.memory_space<vmem>>, vector<1x8x32xf32>,
    %161 = arith.index_cast %96 : i32 to index
    %c0_66 = arith.constant 0 : index
    %c0_67 = arith.constant 0 : index
    %162 = vector.load %arg10[%161, %c0_66, %c0_67] : memref<2x8x32xf32, #tpu.memory_space<vmem>>, vector<1x8x32xf32>
    %163 = vector.shape_cast %162 : vector<1x8x32xf32> to vector<8x32xf32>
    %164 = vector.shape_cast %156 : vector<8x32xf32> to vector<1x8x32xf32>
    tpu.vector_store %arg10[%161, %c0_66, %c0_67], %164 {strides = array<i32>} : memref<2x8x32xf32, #tpu.memory_space<vmem>>, vector<1x8x32xf32>,
    %c2_i32 = arith.constant 2 : i32
    %c0_68 = arith.constant 0 : index
    %c0_69 = arith.constant 0 : index
    %165 = vector.load %arg15[%c0_68, %c0_69] : memref<8x32xf32, #tpu.memory_space<vmem>>, vector<8x32xf32>
    tpu.vector_store %arg15[%c0_68, %c0_69], %131 {strides = array<i32>} : memref<8x32xf32, #tpu.memory_space<vmem>>, vector<8x32xf32>,
    %c0_70 = arith.constant 0 : index
    %c0_71 = arith.constant 0 : index
    %166 = vector.load %arg16[%c0_70, %c0_71] : memref<8x32xf32, #tpu.memory_space<vmem>>, vector<8x32xf32>
    tpu.vector_store %arg16[%c0_70, %c0_71], %129 {strides = array<i32>} : memref<8x32xf32, #tpu.memory_space<vmem>>, vector<8x32xf32>,
    %c0_72 = arith.constant 0 : index
    %c0_73 = arith.constant 0 : index
    %167 = vector.load %arg17[%c0_72, %c0_73] : memref<8x32xf32, #tpu.memory_space<vmem>>, vector<8x32xf32>
    tpu.vector_store %arg17[%c0_72, %c0_73], %156 {strides = array<i32>} : memref<8x32xf32, #tpu.memory_space<vmem>>, vector<8x32xf32>,
    %c0_74 = arith.constant 0 : index
    %c0_75 = arith.constant 0 : index
    %168 = vector.load %arg18[%c0_74, %c0_75] : memref<8x32xf32, #tpu.memory_space<vmem>>, vector<8x32xf32>
    tpu.vector_store %arg18[%c0_74, %c0_75], %154 {strides = array<i32>} : memref<8x32xf32, #tpu.memory_space<vmem>>, vector<8x32xf32>,
    %c0_76 = arith.constant 0 : index
    %c0_77 = arith.constant 0 : index
    %c0_78 = arith.constant 0 : index
    %169 = vector.load %arg11[%c0_76, %c0_77, %c0_78] : memref<2x8x32xf32, #tpu.memory_space<vmem>>, vector<1x8x32xf32>
    %170 = vector.shape_cast %169 : vector<1x8x32xf32> to vector<8x32xf32>
    %171 = vector.shape_cast %131 : vector<8x32xf32> to vector<1x8x32xf32>
    tpu.vector_store %arg11[%c0_76, %c0_77, %c0_78], %171 {strides = array<i32>} : memref<2x8x32xf32, #tpu.memory_space<vmem>>, vector<1x8x32xf32>,
    %c1 = arith.constant 1 : index
    %c0_79 = arith.constant 0 : index
    %c0_80 = arith.constant 0 : index
    %172 = vector.load %arg11[%c1, %c0_79, %c0_80] : memref<2x8x32xf32, #tpu.memory_space<vmem>>, vector<1x8x32xf32>
    %173 = vector.shape_cast %172 : vector<1x8x32xf32> to vector<8x32xf32>
    %174 = vector.shape_cast %156 : vector<8x32xf32> to vector<1x8x32xf32>
    tpu.vector_store %arg11[%c1, %c0_79, %c0_80], %174 {strides = array<i32>} : memref<2x8x32xf32, #tpu.memory_space<vmem>>, vector<1x8x32xf32>,
    %c0_81 = arith.constant 0 : index
    %c0_82 = arith.constant 0 : index
    %c0_83 = arith.constant 0 : index
    %175 = vector.load %arg12[%c0_81, %c0_82, %c0_83] : memref<2x8x32xf32, #tpu.memory_space<vmem>>, vector<1x8x32xf32>
    %176 = vector.shape_cast %175 : vector<1x8x32xf32> to vector<8x32xf32>
    %177 = vector.shape_cast %129 : vector<8x32xf32> to vector<1x8x32xf32>
    tpu.vector_store %arg12[%c0_81, %c0_82, %c0_83], %177 {strides = array<i32>} : memref<2x8x32xf32, #tpu.memory_space<vmem>>, vector<1x8x32xf32>,
    %c1_84 = arith.constant 1 : index
    %c0_85 = arith.constant 0 : index
    %c0_86 = arith.constant 0 : index
    %178 = vector.load %arg12[%c1_84, %c0_85, %c0_86] : memref<2x8x32xf32, #tpu.memory_space<vmem>>, vector<1x8x32xf32>
    %179 = vector.shape_cast %178 : vector<1x8x32xf32> to vector<8x32xf32>
    %180 = vector.shape_cast %154 : vector<8x32xf32> to vector<1x8x32xf32>
    tpu.vector_store %arg12[%c1_84, %c0_85, %c0_86], %180 {strides = array<i32>} : memref<2x8x32xf32, #tpu.memory_space<vmem>>, vector<1x8x32xf32>,
    return
  }
  func.func @transform_0(%arg0: i32) -> (i32, i32, i32) {
    %c0_i32 = arith.constant 0 : i32
    %c0_i32_0 = arith.constant 0 : i32
    %c0_i32_1 = arith.constant 0 : i32
    return %arg0, %c0_i32, %c0_i32_0 : i32, i32, i32
  }
  func.func @transform_1(%arg0: i32) -> (i32, i32, i32) {
    %c1_i32 = arith.constant 1 : i32
    %0 = arith.subi %c1_i32, %arg0 : i32
    %c0_i32 = arith.constant 0 : i32
    %c0_i32_0 = arith.constant 0 : i32
    %c0_i32_1 = arith.constant 0 : i32
    return %0, %c0_i32, %c0_i32_0 : i32, i32, i32
  }
  func.func @transform_2(%arg0: i32) -> (i32, i32) {
    %c0_i32 = arith.constant 0 : i32
    %c0_i32_0 = arith.constant 0 : i32
    %c0_i32_1 = arith.constant 0 : i32
    return %c0_i32, %c0_i32_0 : i32, i32
  }
  func.func @transform_3(%arg0: i32) -> (i32, i32) {
    %c0_i32 = arith.constant 0 : i32
    %c0_i32_0 = arith.constant 0 : i32
    %c0_i32_1 = arith.constant 0 : i32
    return %c0_i32, %c0_i32_0 : i32, i32
  }
  func.func @transform_4(%arg0: i32) -> (i32, i32) {
    %c0_i32 = arith.constant 0 : i32
    %c0_i32_0 = arith.constant 0 : i32
    %c0_i32_1 = arith.constant 0 : i32
    return %c0_i32, %c0_i32_0 : i32, i32
  }
  func.func @transform_5(%arg0: i32) -> (i32, i32) {
    %c0_i32 = arith.constant 0 : i32
    %c0_i32_0 = arith.constant 0 : i32
    %c0_i32_1 = arith.constant 0 : i32
    return %c0_i32, %c0_i32_0 : i32, i32
  }
  func.func @transform_6(%arg0: i32) -> (i32, i32) {
    %c0_i32 = arith.constant 0 : i32
    %c0_i32_0 = arith.constant 0 : i32
    %c0_i32_1 = arith.constant 0 : i32
    return %c0_i32, %c0_i32_0 : i32, i32
  }
  func.func @transform_7(%arg0: i32) -> (i32, i32) {
    %c0_i32 = arith.constant 0 : i32
    %c0_i32_0 = arith.constant 0 : i32
    %c0_i32_1 = arith.constant 0 : i32
    return %c0_i32, %c0_i32_0 : i32, i32
  }
  func.func @transform_8(%arg0: i32) -> (i32, i32, i32) {
    %c0_i32 = arith.constant 0 : i32
    %c0_i32_0 = arith.constant 0 : i32
    %c0_i32_1 = arith.constant 0 : i32
    return %arg0, %c0_i32, %c0_i32_0 : i32, i32, i32
  }
  func.func @transform_9(%arg0: i32) -> (i32, i32, i32) {
    %c1_i32 = arith.constant 1 : i32
    %0 = arith.subi %c1_i32, %arg0 : i32
    %c0_i32 = arith.constant 0 : i32
    %c0_i32_0 = arith.constant 0 : i32
    %c0_i32_1 = arith.constant 0 : i32
    return %0, %c0_i32, %c0_i32_0 : i32, i32, i32
  }
  func.func @transform_10(%arg0: i32) -> (i32, i32, i32) {
    %c0_i32 = arith.constant 0 : i32
    %c0_i32_0 = arith.constant 0 : i32
    %c0_i32_1 = arith.constant 0 : i32
    %c0_i32_2 = arith.constant 0 : i32
    return %c0_i32, %c0_i32_0, %c0_i32_1 : i32, i32, i32
  }
  func.func @transform_11(%arg0: i32) -> (i32, i32, i32) {
    %c0_i32 = arith.constant 0 : i32
    %c0_i32_0 = arith.constant 0 : i32
    %c0_i32_1 = arith.constant 0 : i32
    %c0_i32_2 = arith.constant 0 : i32
    return %c0_i32, %c0_i32_0, %c0_i32_1 : i32, i32, i32
  }
}

</mosaic_0001>

<llo_original>
// kernel: pblstm_forward.1
$region0: #{pblstm_forward.1}
  #allocation0 [shape = 'u32[]', space=smem, size = 0x4, offset = 0x4, fixed_abs, tag = 'smem constant byte address 0x4 - core index']
  #allocation1 [shape = 'u32[144,128]{1,0:T(1,128)}', space=vmem, size = 0x12000, scoped, tag = 'internal scratch']
  #allocation2 [shape = 'f32[2,8,128]{2,1,0:T(8,128)}', space=vmem, size = 0x2000, scoped, tag = 'scratch operand']
  #allocation3 [shape = 'f32[2,8,128]{2,1,0:T(8,128)}', space=vmem, size = 0x2000, scoped, tag = 'scratch operand']
  #allocation4 [shape = 'f32[8,32]{1,0:T(8,128)}', space=vmem, size = 0x1000, scoped, tag = 'scratch operand']
  #allocation5 [shape = 'f32[8,32]{1,0:T(8,128)}', space=vmem, size = 0x1000, scoped, tag = 'scratch operand']
  #allocation6 [shape = 'f32[8,32]{1,0:T(8,128)}', space=vmem, size = 0x1000, scoped, tag = 'scratch operand']
  #allocation7 [shape = 'f32[8,32]{1,0:T(8,128)}', space=vmem, size = 0x1000, scoped, tag = 'scratch operand']
  %s0 = inlined_call_operand.vmem [shape: f32[4,8,32], index: 0, kind: input, shape index: {}, may-alias: {0,1}]
  %s1 = inlined_call_operand.vmem [shape: f32[4,8,32], index: 1, kind: input, shape index: {}, may-alias: {0,1}]
  %s2 = inlined_call_operand.vmem [shape: f32[32,128], index: 2, kind: input, shape index: {}]
  %s3 = inlined_call_operand.vmem [shape: f32[32,128], index: 3, kind: input, shape index: {}]
  %s4 = inlined_call_operand.vmem [shape: f32[1,128], index: 4, kind: input, shape index: {}]
  %s5 = inlined_call_operand.hbm [shape: f32[32,128], index: 5, kind: input, shape index: {}]
  %s6 = inlined_call_operand.hbm [shape: f32[32,128], index: 6, kind: input, shape index: {}]
  %s7 = inlined_call_operand.vmem [shape: f32[1,128], index: 7, kind: input, shape index: {}]
  %s8 = inlined_call_operand.vmem [shape: f32[4,8,32], index: 8, kind: output, shape index: {0}]
  %s9 = inlined_call_operand.vmem [shape: f32[4,8,32], index: 9, kind: output, shape index: {1}]
  %s10 = inlined_call_operand.vmem [shape: f32[2,8,32], index: 10, kind: output, shape index: {2}]
  %s11 = inlined_call_operand.vmem [shape: f32[2,8,32], index: 11, kind: output, shape index: {3}]
  %12 = xla_tuple %s8, %s9, %s10, %s11
  %s13 = sld [smem:[#allocation0]]
  $region101: #{pblstm_forward.1} parent=0
    _
  %s15 = ssub.s32 1, %s13
  %s16 = scalar_select 0, %s15, %s13
  $region1: #{pblstm_forward.1} parent=0
    #allocation8 [shape = 'u8[16384]{0}', space=vmem, size = 0x4000, scoped, tag = 'input window, operand 5, single buffered']
    #allocation9 [shape = 's32[2]{0}', space=sflag, size = 0x8, scoped, tag = 'scoped memory for pblstm_forward.1']
    #allocation10 [shape = 'u8[16384]{0}', space=vmem, size = 0x4000, scoped, tag = 'input window, operand 6, single buffered']
    #allocation11 [shape = 's32[1]{0}', space=sflag, size = 0x4, scoped, tag = 'scoped memory for pblstm_forward.1']
    %17 = vsyncpa [#allocation9], 0
    %18 = vsyncpa [#allocation11], 0
    loop: start=0, step=1, limit=4
    $region2: #{pblstm_forward.1} parent=1 // loop_pre_header
      _
    $region3: #{pblstm_forward.1} parent=1 // loop_header
      %s20 = sphi 0, %s24
      %p21 = scmp.ge.s32.totalorder %s20, 4
      %s30 = sphi 0, %s32
      %s33 = sphi 0, %s30
      %s34 = sphi 0, %s33
      %s50 = sphi 0, %s34
      %s58 = sphi 0, %s60
      %s61 = sphi 0, %s58
      %s62 = sphi 0, %s61
      %s78 = sphi 0, %s62
      %s82 = sphi 0, %s82
      %s84 = sphi 0, %s82
      %s85 = sphi 0, %s84
      %s99 = sphi 0, %s85
      %s103 = sphi 0, %s103
      %s105 = sphi 0, %s103
      %s106 = sphi 0, %s105
      %s120 = sphi 0, %s106
      %s124 = sphi 0, %s124
      %s126 = sphi 0, %s124
      %s127 = sphi 0, %s126
      %s141 = sphi 0, %s127
      %s145 = sphi 0, %s145
      %s147 = sphi 0, %s145
      %s148 = sphi 0, %s147
      %s162 = sphi 0, %s148
      %s166 = sphi 0, %s166
      %s168 = sphi 0, %s166
      %s169 = sphi 0, %s168
      %s183 = sphi 0, %s169
      %s187 = sphi 0, %s187
      %s189 = sphi 0, %s187
      %s190 = sphi 0, %s189
      %s204 = sphi 0, %s190
      %s210 = sphi 0, %s212
      %s213 = sphi 0, %s210
      %s214 = sphi 0, %s213
      %s230 = sphi 0, %s214
      %s238 = sphi 0, %s240
      %s241 = sphi 0, %s238
      %s242 = sphi 0, %s241
      %s258 = sphi 0, %s242
      %s262 = sphi 0, %s262
      %s264 = sphi 0, %s262
      %s265 = sphi 0, %s264
      %s279 = sphi 0, %s265
      %s283 = sphi 0, %s283
      %s285 = sphi 0, %s283
      %s286 = sphi 0, %s285
      %s300 = sphi 0, %s286
    $region4: #{pblstm_forward.1} parent=1 // loop_header_branch
      %23 = sbr.rel (%p21) target = $region8
    $region5: #{pblstm_forward.1} parent=1 // loop_body
      %s25 = ssub.s32 %s20, 1
      %s26 = ssub.s32 %s20, 2
      %s27 = sadd.s32 %s20, 1
      %s28 = ssub.s32 %s20, %s27
      %p29 = scmp.eq.s32.totalorder %s28, 0
      %s31 = sadd.s32 %s30, 1
      %s32 = scalar_select %p29, %s30, %s31
      %p35 = pneg %p29
      %p36 = scmp.eq.s32.totalorder %s20, 1
      %p37 = por %p35, %p36
      %p38 = scmp.ne.s32.totalorder %s30, %s33
      %p39 = scmp.eq.s32.totalorder %s20, 0
      %p40 = por %p38, %p39
      %p41 = scmp.ne.s32.totalorder %s30, %s33
      %p42 = scmp.eq.s32.totalorder %s25, 1
      %p43 = por %p41, %p42
      %p44 = scmp.ne.s32.totalorder %s33, %s34
      %p45 = scmp.eq.s32.totalorder %s25, 0
      %p46 = por %p44, %p45
      %p47 = scmp.ne.s32.totalorder %s33, %s34
      %p48 = scmp.eq.s32.totalorder %s26, 1
      %p49 = por %p47, %p48
      %p51 = scmp.ne.s32.totalorder %s34, %s50
      %p52 = scmp.eq.s32.totalorder %s26, 0
      %p53 = por %p51, %p52
      %s54 = ssub.s32 1, %s20
      %s55 = ssub.s32 1, %s27
      %s56 = ssub.s32 %s54, %s55
      %p57 = scmp.eq.s32.totalorder %s56, 0
      %s59 = sadd.s32 %s58, 1
      %s60 = scalar_select %p57, %s58, %s59
      %p63 = pneg %p57
      %p64 = scmp.eq.s32.totalorder %s20, 1
      %p65 = por %p63, %p64
      %p66 = scmp.ne.s32.totalorder %s58, %s61
      %p67 = scmp.eq.s32.totalorder %s20, 0
      %p68 = por %p66, %p67
      %p69 = scmp.ne.s32.totalorder %s58, %s61
      %p70 = scmp.eq.s32.totalorder %s25, 1
      %p71 = por %p69, %p70
      %p72 = scmp.ne.s32.totalorder %s61, %s62
      %p73 = scmp.eq.s32.totalorder %s25, 0
      %p74 = por %p72, %p73
      %p75 = scmp.ne.s32.totalorder %s61, %s62
      %p76 = scmp.eq.s32.totalorder %s26, 1
      %p77 = por %p75, %p76
      %p79 = scmp.ne.s32.totalorder %s62, %s78
      %p80 = scmp.eq.s32.totalorder %s26, 0
      %p81 = por %p79, %p80
      %s83 = sadd.s32 %s82, 1
      %p86 = scmp.eq.s32.totalorder %s20, 1
      %p87 = scmp.ne.s32.totalorder %s82, %s84
      %p88 = scmp.eq.s32.totalorder %s20, 0
      %p89 = por %p87, %p88
      %p90 = scmp.ne.s32.totalorder %s82, %s84
      %p91 = scmp.eq.s32.totalorder %s25, 1
      %p92 = por %p90, %p91
      %p93 = scmp.ne.s32.totalorder %s84, %s85
      %p94 = scmp.eq.s32.totalorder %s25, 0
      %p95 = por %p93, %p94
      %p96 = scmp.ne.s32.totalorder %s84, %s85
      %p97 = scmp.eq.s32.totalorder %s26, 1
      %p98 = por %p96, %p97
      %p100 = scmp.ne.s32.totalorder %s85, %s99
      %p101 = scmp.eq.s32.totalorder %s26, 0
      %p102 = por %p100, %p101
      %s104 = sadd.s32 %s103, 1
      %p107 = scmp.eq.s32.totalorder %s20, 1
      %p108 = scmp.ne.s32.totalorder %s103, %s105
      %p109 = scmp.eq.s32.totalorder %s20, 0
      %p110 = por %p108, %p109
      %p111 = scmp.ne.s32.totalorder %s103, %s105
      %p112 = scmp.eq.s32.totalorder %s25, 1
      %p113 = por %p111, %p112
      %p114 = scmp.ne.s32.totalorder %s105, %s106
      %p115 = scmp.eq.s32.totalorder %s25, 0
      %p116 = por %p114, %p115
      %p117 = scmp.ne.s32.totalorder %s105, %s106
      %p118 = scmp.eq.s32.totalorder %s26, 1
      %p119 = por %p117, %p118
      %p121 = scmp.ne.s32.totalorder %s106, %s120
      %p122 = scmp.eq.s32.totalorder %s26, 0
      %p123 = por %p121, %p122
      %s125 = sadd.s32 %s124, 1
      %p128 = scmp.eq.s32.totalorder %s20, 1
      %p129 = scmp.ne.s32.totalorder %s124, %s126
      %p130 = scmp.eq.s32.totalorder %s20, 0
      %p131 = por %p129, %p130
      %p132 = scmp.ne.s32.totalorder %s124, %s126
      %p133 = scmp.eq.s32.totalorder %s25, 1
      %p134 = por %p132, %p133
      %p135 = scmp.ne.s32.totalorder %s126, %s127
      %p136 = scmp.eq.s32.totalorder %s25, 0
      %p137 = por %p135, %p136
      %p138 = scmp.ne.s32.totalorder %s126, %s127
      %p139 = scmp.eq.s32.totalorder %s26, 1
      %p140 = por %p138, %p139
      %p142 = scmp.ne.s32.totalorder %s127, %s141
      %p143 = scmp.eq.s32.totalorder %s26, 0
      %p144 = por %p142, %p143
      %s146 = sadd.s32 %s145, 1
      %p149 = scmp.eq.s32.totalorder %s20, 1
      %p150 = scmp.ne.s32.totalorder %s145, %s147
      %p151 = scmp.eq.s32.totalorder %s20, 0
      %p152 = por %p150, %p151
      %p153 = scmp.ne.s32.totalorder %s145, %s147
      %p154 = scmp.eq.s32.totalorder %s25, 1
      %p155 = por %p153, %p154
      %p156 = scmp.ne.s32.totalorder %s147, %s148
      %p157 = scmp.eq.s32.totalorder %s25, 0
      %p158 = por %p156, %p157
      %p159 = scmp.ne.s32.totalorder %s147, %s148
      %p160 = scmp.eq.s32.totalorder %s26, 1
      %p161 = por %p159, %p160
      %p163 = scmp.ne.s32.totalorder %s148, %s162
      %p164 = scmp.eq.s32.totalorder %s26, 0
      %p165 = por %p163, %p164
      %s167 = sadd.s32 %s166, 1
      %p170 = scmp.eq.s32.totalorder %s20, 1
      %p171 = scmp.ne.s32.totalorder %s166, %s168
      %p172 = scmp.eq.s32.totalorder %s20, 0
      %p173 = por %p171, %p172
      %p174 = scmp.ne.s32.totalorder %s166, %s168
      %p175 = scmp.eq.s32.totalorder %s25, 1
      %p176 = por %p174, %p175
      %p177 = scmp.ne.s32.totalorder %s168, %s169
      %p178 = scmp.eq.s32.totalorder %s25, 0
      %p179 = por %p177, %p178
      %p180 = scmp.ne.s32.totalorder %s168, %s169
      %p181 = scmp.eq.s32.totalorder %s26, 1
      %p182 = por %p180, %p181
      %p184 = scmp.ne.s32.totalorder %s169, %s183
      %p185 = scmp.eq.s32.totalorder %s26, 0
      %p186 = por %p184, %p185
      %s188 = sadd.s32 %s187, 1
      %p191 = scmp.eq.s32.totalorder %s20, 1
      %p192 = scmp.ne.s32.totalorder %s187, %s189
      %p193 = scmp.eq.s32.totalorder %s20, 0
      %p194 = por %p192, %p193
      %p195 = scmp.ne.s32.totalorder %s187, %s189
      %p196 = scmp.eq.s32.totalorder %s25, 1
      %p197 = por %p195, %p196
      %p198 = scmp.ne.s32.totalorder %s189, %s190
      %p199 = scmp.eq.s32.totalorder %s25, 0
      %p200 = por %p198, %p199
      %p201 = scmp.ne.s32.totalorder %s189, %s190
      %p202 = scmp.eq.s32.totalorder %s26, 1
      %p203 = por %p201, %p202
      %p205 = scmp.ne.s32.totalorder %s190, %s204
      %p206 = scmp.eq.s32.totalorder %s26, 0
      %p207 = por %p205, %p206
      %s208 = ssub.s32 %s20, %s27
      %p209 = scmp.eq.s32.totalorder %s208, 0
      %s211 = sadd.s32 %s210, 1
      %s212 = scalar_select %p209, %s210, %s211
      %p215 = pneg %p209
      %p216 = scmp.eq.s32.totalorder %s20, 1
      %p217 = por %p215, %p216
      %p218 = scmp.ne.s32.totalorder %s210, %s213
      %p219 = scmp.eq.s32.totalorder %s20, 0
      %p220 = por %p218, %p219
      %p221 = scmp.ne.s32.totalorder %s210, %s213
      %p222 = scmp.eq.s32.totalorder %s25, 1
      %p223 = por %p221, %p222
      %p224 = scmp.ne.s32.totalorder %s213, %s214
      %p225 = scmp.eq.s32.totalorder %s25, 0
      %p226 = por %p224, %p225
      %p227 = scmp.ne.s32.totalorder %s213, %s214
      %p228 = scmp.eq.s32.totalorder %s26, 1
      %p229 = por %p227, %p228
      %p231 = scmp.ne.s32.totalorder %s214, %s230
      %p232 = scmp.eq.s32.totalorder %s26, 0
      %p233 = por %p231, %p232
      %s234 = ssub.s32 1, %s20
      %s235 = ssub.s32 1, %s27
      %s236 = ssub.s32 %s234, %s235
      %p237 = scmp.eq.s32.totalorder %s236, 0
      %s239 = sadd.s32 %s238, 1
      %s240 = scalar_select %p237, %s238, %s239
      %p243 = pneg %p237
      %p244 = scmp.eq.s32.totalorder %s20, 1
      %p245 = por %p243, %p244
      %p246 = scmp.ne.s32.totalorder %s238, %s241
      %p247 = scmp.eq.s32.totalorder %s20, 0
      %p248 = por %p246, %p247
      %p249 = scmp.ne.s32.totalorder %s238, %s241
      %p250 = scmp.eq.s32.totalorder %s25, 1
      %p251 = por %p249, %p250
      %p252 = scmp.ne.s32.totalorder %s241, %s242
      %p253 = scmp.eq.s32.totalorder %s25, 0
      %p254 = por %p252, %p253
      %p255 = scmp.ne.s32.totalorder %s241, %s242
      %p256 = scmp.eq.s32.totalorder %s26, 1
      %p257 = por %p255, %p256
      %p259 = scmp.ne.s32.totalorder %s242, %s258
      %p260 = scmp.eq.s32.totalorder %s26, 0
      %p261 = por %p259, %p260
      %s263 = sadd.s32 %s262, 1
      %p266 = scmp.eq.s32.totalorder %s20, 1
      %p267 = scmp.ne.s32.totalorder %s262, %s264
      %p268 = scmp.eq.s32.totalorder %s20, 0
      %p269 = por %p267, %p268
      %p270 = scmp.ne.s32.totalorder %s262, %s264
      %p271 = scmp.eq.s32.totalorder %s25, 1
      %p272 = por %p270, %p271
      %p273 = scmp.ne.s32.totalorder %s264, %s265
      %p274 = scmp.eq.s32.totalorder %s25, 0
      %p275 = por %p273, %p274
      %p276 = scmp.ne.s32.totalorder %s264, %s265
      %p277 = scmp.eq.s32.totalorder %s26, 1
      %p278 = por %p276, %p277
      %p280 = scmp.ne.s32.totalorder %s265, %s279
      %p281 = scmp.eq.s32.totalorder %s26, 0
      %p282 = por %p280, %p281
      %s284 = sadd.s32 %s283, 1
      %p287 = scmp.eq.s32.totalorder %s20, 1
      %p288 = scmp.ne.s32.totalorder %s283, %s285
      %p289 = scmp.eq.s32.totalorder %s20, 0
      %p290 = por %p288, %p289
      %p291 = scmp.ne.s32.totalorder %s283, %s285
      %p292 = scmp.eq.s32.totalorder %s25, 1
      %p293 = por %p291, %p292
      %p294 = scmp.ne.s32.totalorder %s285, %s286
      %p295 = scmp.eq.s32.totalorder %s25, 0
      %p296 = por %p294, %p295
      %p297 = scmp.ne.s32.totalorder %s285, %s286
      %p298 = scmp.eq.s32.totalorder %s26, 1
      %p299 = por %p297, %p298
      %p301 = scmp.ne.s32.totalorder %s286, %s300
      %p302 = scmp.eq.s32.totalorder %s26, 0
      %p303 = por %p301, %p302
      %p304 = scmp.le.s32.totalorder 1, %s20
      %p305 = scmp.lt.s32.totalorder %s20, 3
      %p306 = pnand %p304, %p305
      %p307 = pneg %p306
      // Predicated region
      $region9: #{pblstm_forward.1} parent=5 // pred_check
        _
      $region10: #{pblstm_forward.1} parent=5 // pred_check_branch
        %309 = sbr.rel (%p306) target = $region12
      $region11: #{pblstm_forward.1} parent=5 // pred_region
        %s310 = ssub.s32 %s20, 1
        // Predicated region
        $region13: #{pblstm_forward.1} parent=11 // pred_check
          %p311 = pneg %p95
        $region14: #{pblstm_forward.1} parent=11 // pred_check_branch
          %313 = sbr.rel (%p311) target = $region16
        $region15: #{pblstm_forward.1} parent=11 // pred_region
          _
        $region16: #{pblstm_forward.1} parent=11 // pred_fallthru
          _
        // Predicated region
        $region17: #{pblstm_forward.1} parent=11 // pred_check
          %p314 = pneg %p116
        $region18: #{pblstm_forward.1} parent=11 // pred_check_branch
          %316 = sbr.rel (%p314) target = $region20
        $region19: #{pblstm_forward.1} parent=11 // pred_region
          _
        $region20: #{pblstm_forward.1} parent=11 // pred_fallthru
          _
        // Predicated region
        $region21: #{pblstm_forward.1} parent=11 // pred_check
          %p317 = pneg %p137
        $region22: #{pblstm_forward.1} parent=11 // pred_check_branch
          %319 = sbr.rel (%p317) target = $region24
        $region23: #{pblstm_forward.1} parent=11 // pred_region
          _
        $region24: #{pblstm_forward.1} parent=11 // pred_fallthru
          _
        // Predicated region
        $region25: #{pblstm_forward.1} parent=11 // pred_check
          %p320 = pneg %p158
        $region26: #{pblstm_forward.1} parent=11 // pred_check_branch
          %322 = sbr.rel (%p320) target = $region28
        $region27: #{pblstm_forward.1} parent=11 // pred_region
          %s324 = ssub.s32 512, 512
          %325 = vsyncadd [#allocation9], %s324
          %s326 = sshll.u32 [#allocation8], 4
          %s327 = int_to_ptr.vmem [resolvable:$true] %s326
          %332 = dma.hbm_to_vmem [thread:$0]  %s5, 512, %s327, [#allocation9], 128, 128, 8
        $region28: #{pblstm_forward.1} parent=11 // pred_fallthru
          _
        // Predicated region
        $region29: #{pblstm_forward.1} parent=11 // pred_check
          %p333 = pneg %p179
        $region30: #{pblstm_forward.1} parent=11 // pred_check_branch
          %335 = sbr.rel (%p333) target = $region32
        $region31: #{pblstm_forward.1} parent=11 // pred_region
          %s337 = ssub.s32 512, 512
          %338 = vsyncadd [#allocation11], %s337
          %s339 = sshll.u32 [#allocation10], 4
          %s340 = int_to_ptr.vmem [resolvable:$true] %s339
          %345 = dma.hbm_to_vmem [thread:$0]  %s6, 512, %s340, [#allocation11], 128, 128, 8
        $region32: #{pblstm_forward.1} parent=11 // pred_fallthru
          _
        // Predicated region
        $region33: #{pblstm_forward.1} parent=11 // pred_check
          %p346 = pneg %p200
        $region34: #{pblstm_forward.1} parent=11 // pred_check_branch
          %348 = sbr.rel (%p346) target = $region36
        $region35: #{pblstm_forward.1} parent=11 // pred_region
          _
        $region36: #{pblstm_forward.1} parent=11 // pred_fallthru
          _
      $region12: #{pblstm_forward.1} parent=5 // pred_fallthru
        _
      %p349 = scmp.lt.s32.totalorder %s20, 2
      // Predicated region
      $region37: #{pblstm_forward.1} parent=5 // pred_check
        %p350 = pneg %p349
      $region38: #{pblstm_forward.1} parent=5 // pred_check_branch
        %352 = sbr.rel (%p350) target = $region40
      $region39: #{pblstm_forward.1} parent=5 // pred_region
        // Predicated region
        $region41: #{pblstm_forward.1} parent=39 // pred_check
          %p353 = pneg %p40
        $region42: #{pblstm_forward.1} parent=39 // pred_check_branch
          %355 = sbr.rel (%p353) target = $region44
        $region43: #{pblstm_forward.1} parent=39 // pred_region
          %s356 = smul.u32 2, %s20
          %p357 = scmp.lt.s32.totalorder %s356, 3
          %s358 = scalar_select %p357, %s356, 3
          %s359 = smul.addr %s358, 8
          %s360 = scalar_lea.vmem %s0, %s359
          %s361 = smul.u32 2, %s20
        $region44: #{pblstm_forward.1} parent=39 // pred_fallthru
          _
        // Predicated region
        $region45: #{pblstm_forward.1} parent=39 // pred_check
          %p362 = pneg %p68
        $region46: #{pblstm_forward.1} parent=39 // pred_check_branch
          %364 = sbr.rel (%p362) target = $region48
        $region47: #{pblstm_forward.1} parent=39 // pred_region
          %s365 = ssub.s32 1, %s20
          %s366 = smul.u32 2, %s365
          %p367 = scmp.lt.s32.totalorder %s366, 3
          %s368 = scalar_select %p367, %s366, 3
          %s369 = smul.addr %s368, 8
          %s370 = scalar_lea.vmem %s1, %s369
          %s371 = ssub.s32 1, %s20
          %s372 = smul.u32 2, %s371
        $region48: #{pblstm_forward.1} parent=39 // pred_fallthru
          _
      $region40: #{pblstm_forward.1} parent=5 // pred_fallthru
        _
      %p373 = scmp.le.s32.totalorder 1, %s20
      %p374 = scmp.lt.s32.totalorder %s20, 3
      %p375 = pnand %p373, %p374
      %p376 = pneg %p375
      // Predicated region
      $region49: #{pblstm_forward.1} parent=5 // pred_check
        _
      $region50: #{pblstm_forward.1} parent=5 // pred_check_branch
        %378 = sbr.rel (%p375) target = $region52
      $region51: #{pblstm_forward.1} parent=5 // pred_region
        %s379 = ssub.s32 %s20, 1
        // Predicated region
        $region53: #{pblstm_forward.1} parent=51 // pred_check
          %p380 = pneg %p158
        $region54: #{pblstm_forward.1} parent=51 // pred_check_branch
          %382 = sbr.rel (%p380) target = $region56
        $region55: #{pblstm_forward.1} parent=51 // pred_region
          %383 = dma.done [#allocation9], 512
        $region56: #{pblstm_forward.1} parent=51 // pred_fallthru
          _
        // Predicated region
        $region57: #{pblstm_forward.1} parent=51 // pred_check
          %p384 = pneg %p179
        $region58: #{pblstm_forward.1} parent=51 // pred_check_branch
          %386 = sbr.rel (%p384) target = $region60
        $region59: #{pblstm_forward.1} parent=51 // pred_region
          %387 = dma.done [#allocation11], 512
        $region60: #{pblstm_forward.1} parent=51 // pred_fallthru
          _
        %s388 = smul.u32 2, %s25
        %p389 = scmp.lt.s32.totalorder %s388, 3
        %s390 = scalar_select %p389, %s388, 3
        %s391 = smul.addr %s390, 8
        %s392 = scalar_lea.vmem %s0, %s391
        %p393 = pneg %p46
        %p394 = pneg %p43
        %s395 = ssub.s32 1, %s25
        %s396 = smul.u32 2, %s395
        %p397 = scmp.lt.s32.totalorder %s396, 3
        %s398 = scalar_select %p397, %s396, 3
        %s399 = smul.addr %s398, 8
        %s400 = scalar_lea.vmem %s1, %s399
        %p401 = pneg %p74
        %p402 = pneg %p71
        %p403 = pneg %p95
        %p404 = pneg %p92
        %p405 = pneg %p116
        %p406 = pneg %p113
        %p407 = pneg %p137
        %p408 = pneg %p134
        %p409 = pneg %p158
        %p410 = pneg %p155
        %p411 = pneg %p179
        %p412 = pneg %p176
        %p413 = pneg %p200
        %p414 = pneg %p197
        %p415 = pneg %p226
        %p416 = pneg %p223
        %s417 = smul.u32 2, %s25
        %p418 = scmp.lt.s32.totalorder %s417, 3
        %s419 = scalar_select %p418, %s417, 3
        %s420 = smul.addr %s419, 8
        %s421 = scalar_lea.vmem %s8, %s420
        %p422 = pneg %p254
        %p423 = pneg %p251
        %s424 = ssub.s32 1, %s25
        %s425 = smul.u32 2, %s424
        %p426 = scmp.lt.s32.totalorder %s425, 3
        %s427 = scalar_select %p426, %s425, 3
        %s428 = smul.addr %s427, 8
        %s429 = scalar_lea.vmem %s9, %s428
        %p430 = pneg %p275
        %p431 = pneg %p272
        %p432 = pneg %p296
        %p433 = pneg %p293
        %s434 = smul.u32 2, %s25
        %p435 = scmp.lt.s32.totalorder %s434, 3
        %s436 = scalar_select %p435, %s434, 3
        %s437 = smul.addr %s436, 8
        %s438 = scalar_lea.vmem %s0, %s437
        %s439 = smul.u32 2, %s25
        %s440 = ssub.s32 1, %s25
        %s441 = smul.u32 2, %s440
        %p442 = scmp.lt.s32.totalorder %s441, 3
        %s443 = scalar_select %p442, %s441, 3
        %s444 = smul.addr %s443, 8
        %s445 = scalar_lea.vmem %s1, %s444
        %s446 = ssub.s32 1, %s25
        %s447 = smul.u32 2, %s446
        %s448 = smul.u32 2, %s25
        %p449 = scmp.lt.s32.totalorder %s448, 3
        %s450 = scalar_select %p449, %s448, 3
        %s451 = smul.addr %s450, 8
        %s452 = scalar_lea.vmem %s8, %s451
        %s453 = smul.u32 2, %s25
        %s454 = ssub.s32 1, %s25
        %s455 = smul.u32 2, %s454
        %p456 = scmp.lt.s32.totalorder %s455, 3
        %s457 = scalar_select %p456, %s455, 3
        %s458 = smul.addr %s457, 8
        %s459 = scalar_lea.vmem %s9, %s458
        %s460 = ssub.s32 1, %s25
        %s461 = smul.u32 2, %s460
        %p462 = scmp.eq.s32.totalorder %s25, 0
        // Predicated region
        $region61: #{pblstm_forward.1} parent=51 // pred_check
          %p463 = pneg %p462
        $region62: #{pblstm_forward.1} parent=51 // pred_check_branch
          %465 = sbr.rel (%p463) target = $region64
        $region63: #{pblstm_forward.1} parent=51 // pred_region
          %vm466 = vcmask 261120
          %467 = vst.msk [vmem:[#allocation4] sm:$0xff] %vm466, 0.0
          %468 = vst.msk [vmem:[#allocation5] sm:$0xff] %vm466, 0.0
          %469 = vst.msk [vmem:[#allocation6] sm:$0xff] %vm466, 0.0
          %470 = vst.msk [vmem:[#allocation7] sm:$0xff] %vm466, 0.0
        $region64: #{pblstm_forward.1} parent=51 // pred_fallthru
          _
        %v471 = vld [vmem:[%s438] sm:$0xff]
        %v472 = vld [vmem:[%s438 + $0x8] sm:$0xff]
        %v473 = vld [vmem:[%s445] sm:$0xff]
        %v474 = vld [vmem:[%s445 + $0x8] sm:$0xff]
        %v475 = vld [vmem:[%s2] sm:$0xff]
        %v476 = vld [vmem:[%s2 + $0x8] sm:$0xff]
        %v477 = vld [vmem:[%s2 + $0x10] sm:$0xff]
        %v478 = vld [vmem:[%s2 + $0x18] sm:$0xff]
        %v479 = vld [vmem:[%s4] sm:$0x1]
        %v481 = vlaneseq
        %v482 = vshrl.u32 %v481, 7
        %v483 = vsub.s32 0, %v482
        %v484 = vrot.slane %v479, %v483
        %vm486 = vcmask 261120
        %v488 = vsel %vm486, %v471, 0
        %v491 = vsel %vm486, %v472, 0
        %493 = vmatprep.subr.mxu0 0.0
        %494 = vmatpush1.msra.mxu0 0.0
        %495 = vmatprep.subr.mxu0 0.0
        %496 = vmatpush1.msra.mxu0 0.0
        %497 = vmatprep.subr.mxu0 0.0
        %498 = vmatpush1.msra.mxu0 0.0
        %499 = vmatprep.subr.mxu0 0.0
        %500 = vmatpush1.msra.mxu0 0.0
        %501 = vmatprep.subr.mxu0 0.0
        %502 = vmatpush1.msra.mxu0 0.0
        %503 = vmatprep.subr.mxu0 0.0
        %504 = vmatpush1.msra.mxu0 0.0
        %505 = vmatprep.subr.mxu0 0.0
        %506 = vmatpush1.msra.mxu0 0.0
        %507 = vmatprep.subr.mxu0 0.0
        %508 = vmatpush1.msra.mxu0 0.0
        %509 = vmatprep.subr.mxu0 0.0
        %510 = vmatpush1.msra.mxu0 0.0
        %511 = vmatprep.subr.mxu0 0.0
        %512 = vmatpush1.msra.mxu0 0.0
        %513 = vmatprep.subr.mxu0 0.0
        %514 = vmatpush1.msra.mxu0 0.0
        %515 = vmatprep.subr.mxu0 0.0
        %516 = vmatpush1.msra.mxu0 0.0
        %517 = vmatprep.subr.mxu0 0.0
        %518 = vmatpush1.msra.mxu0 %v478
        %519 = vmatprep.subr.mxu0 0.0
        %520 = vmatpush1.msra.mxu0 %v477
        %521 = vmatprep.subr.mxu0 0.0
        %522 = vmatpush1.msra.mxu0 %v476
        %523 = vmatprep.subr.mxu0 0.0
        %524 = vmatpush1.msra.mxu0 %v475
        %525 = vmatprep.subr.mxu0 0.0
        %526 = vmatpush2.msra.mxu0 0.0
        %527 = vmatprep.subr.mxu0 0.0
        %528 = vmatpush2.msra.mxu0 0.0
        %529 = vmatprep.subr.mxu0 0.0
        %530 = vmatpush2.msra.mxu0 0.0
        %531 = vmatprep.subr.mxu0 0.0
        %532 = vmatpush2.msra.mxu0 0.0
        %533 = vmatprep.subr.mxu0 0.0
        %534 = vmatpush2.msra.mxu0 0.0
        %535 = vmatprep.subr.mxu0 0.0
        %536 = vmatpush2.msra.mxu0 0.0
        %537 = vmatprep.subr.mxu0 0.0
        %538 = vmatpush2.msra.mxu0 0.0
        %539 = vmatprep.subr.mxu0 0.0
        %540 = vmatpush2.msra.mxu0 0.0
        %541 = vmatprep.subr.mxu0 0.0
        %542 = vmatpush2.msra.mxu0 0.0
        %543 = vmatprep.subr.mxu0 0.0
        %544 = vmatpush2.msra.mxu0 0.0
        %545 = vmatprep.subr.mxu0 0.0
        %546 = vmatpush2.msra.mxu0 0.0
        %547 = vmatprep.subr.mxu0 0.0
        %548 = vmatpush2.msra.mxu0 0.0
        %549 = vmatprep.subr.mxu0 0.0
        %550 = vmatpush2.msra.mxu0 0.0
        %551 = vmatprep.subr.mxu0 0.0
        %552 = vmatpush2.msra.mxu0 0.0
        %553 = vmatprep.subr.mxu0 0.0
        %554 = vmatpush2.msra.mxu0 0.0
        %555 = vmatprep.subr.mxu0 0.0
        %556 = vmatpush2.msra.mxu0 0.0
        %557 = vmatprep.mubr.f32.mxu0 0.0
        %558 = vmatmul.mubr.f32.gmra.mxu0 %v488
        %v559 = vpop.f32.mrf.mxu0
        %v560 = vadd.f32 %v484, %v559
        %v561 = vpop.f32.mrf.mxu0
        %562 = vmatprep.mubr.f32.mxu0 0.0
        %563 = vmatmul.mubr.f32.gmra.mxu0 %v491
        %v564 = vpop.f32.mrf.mxu0
        %v565 = vadd.f32 %v484, %v564
        %v566 = vpop.f32.mrf.mxu0
        %567 = vdwg.mxu0
        %568 = vst [vmem:[#allocation2] sm:$0xff] %v560
        %569 = vst [vmem:[#allocation2 + $0x8] sm:$0xff] %v565
        %v570 = vld [vmem:[#allocation8] sm:$0xff]
        %v571 = vld [vmem:[#allocation8 + $0x8] sm:$0xff]
        %v572 = vld [vmem:[#allocation8 + $0x10] sm:$0xff]
        %v573 = vld [vmem:[#allocation8 + $0x18] sm:$0xff]
        %v574 = vld [vmem:[%s7] sm:$0x1]
        %v576 = vlaneseq
        %v577 = vshrl.u32 %v576, 7
        %v578 = vsub.s32 0, %v577
        %v579 = vrot.slane %v574, %v578
        %v582 = vsel %vm486, %v473, 0
        %v585 = vsel %vm486, %v474, 0
        %587 = vmatprep.subr.mxu0 0.0
        %588 = vmatpush1.msra.mxu0 0.0
        %589 = vmatprep.subr.mxu0 0.0
        %590 = vmatpush1.msra.mxu0 0.0
        %591 = vmatprep.subr.mxu0 0.0
        %592 = vmatpush1.msra.mxu0 0.0
        %593 = vmatprep.subr.mxu0 0.0
        %594 = vmatpush1.msra.mxu0 0.0
        %595 = vmatprep.subr.mxu0 0.0
        %596 = vmatpush1.msra.mxu0 0.0
        %597 = vmatprep.subr.mxu0 0.0
        %598 = vmatpush1.msra.mxu0 0.0
        %599 = vmatprep.subr.mxu0 0.0
        %600 = vmatpush1.msra.mxu0 0.0
        %601 = vmatprep.subr.mxu0 0.0
        %602 = vmatpush1.msra.mxu0 0.0
        %603 = vmatprep.subr.mxu0 0.0
        %604 = vmatpush1.msra.mxu0 0.0
        %605 = vmatprep.subr.mxu0 0.0
        %606 = vmatpush1.msra.mxu0 0.0
        %607 = vmatprep.subr.mxu0 0.0
        %608 = vmatpush1.msra.mxu0 0.0
        %609 = vmatprep.subr.mxu0 0.0
        %610 = vmatpush1.msra.mxu0 0.0
        %611 = vmatprep.subr.mxu0 0.0
        %612 = vmatpush1.msra.mxu0 %v573
        %613 = vmatprep.subr.mxu0 0.0
        %614 = vmatpush1.msra.mxu0 %v572
        %615 = vmatprep.subr.mxu0 0.0
        %616 = vmatpush1.msra.mxu0 %v571
        %617 = vmatprep.subr.mxu0 0.0
        %618 = vmatpush1.msra.mxu0 %v570
        %619 = vmatprep.subr.mxu0 0.0
        %620 = vmatpush2.msra.mxu0 0.0
        %621 = vmatprep.subr.mxu0 0.0
        %622 = vmatpush2.msra.mxu0 0.0
        %623 = vmatprep.subr.mxu0 0.0
        %624 = vmatpush2.msra.mxu0 0.0
        %625 = vmatprep.subr.mxu0 0.0
        %626 = vmatpush2.msra.mxu0 0.0
        %627 = vmatprep.subr.mxu0 0.0
        %628 = vmatpush2.msra.mxu0 0.0
        %629 = vmatprep.subr.mxu0 0.0
        %630 = vmatpush2.msra.mxu0 0.0
        %631 = vmatprep.subr.mxu0 0.0
        %632 = vmatpush2.msra.mxu0 0.0
        %633 = vmatprep.subr.mxu0 0.0
        %634 = vmatpush2.msra.mxu0 0.0
        %635 = vmatprep.subr.mxu0 0.0
        %636 = vmatpush2.msra.mxu0 0.0
        %637 = vmatprep.subr.mxu0 0.0
        %638 = vmatpush2.msra.mxu0 0.0
        %639 = vmatprep.subr.mxu0 0.0
        %640 = vmatpush2.msra.mxu0 0.0
        %641 = vmatprep.subr.mxu0 0.0
        %642 = vmatpush2.msra.mxu0 0.0
        %643 = vmatprep.subr.mxu0 0.0
        %644 = vmatpush2.msra.mxu0 0.0
        %645 = vmatprep.subr.mxu0 0.0
        %646 = vmatpush2.msra.mxu0 0.0
        %647 = vmatprep.subr.mxu0 0.0
        %648 = vmatpush2.msra.mxu0 0.0
        %649 = vmatprep.subr.mxu0 0.0
        %650 = vmatpush2.msra.mxu0 0.0
        %651 = vmatprep.mubr.f32.mxu0 0.0
        %652 = vmatmul.mubr.f32.gmra.mxu0 %v582
        %v653 = vpop.f32.mrf.mxu0
        %v654 = vadd.f32 %v579, %v653
        %v655 = vpop.f32.mrf.mxu0
        %656 = vmatprep.mubr.f32.mxu0 0.0
        %657 = vmatmul.mubr.f32.gmra.mxu0 %v585
        %v658 = vpop.f32.mrf.mxu0
        %v659 = vadd.f32 %v579, %v658
        %v660 = vpop.f32.mrf.mxu0
        %661 = vdwg.mxu0
        %662 = vst [vmem:[#allocation3] sm:$0xff] %v654
        %663 = vst [vmem:[#allocation3 + $0x8] sm:$0xff] %v659
        %v664 = vld [vmem:[%s3] sm:$0xff]
        %v665 = vld [vmem:[%s3 + $0x8] sm:$0xff]
        %v666 = vld [vmem:[%s3 + $0x10] sm:$0xff]
        %v667 = vld [vmem:[%s3 + $0x18] sm:$0xff]
        %v668 = vld [vmem:[#allocation10] sm:$0xff]
        %v669 = vld [vmem:[#allocation10 + $0x8] sm:$0xff]
        %v670 = vld [vmem:[#allocation10 + $0x10] sm:$0xff]
        %v671 = vld [vmem:[#allocation10 + $0x18] sm:$0xff]
        %v672 = vld [vmem:[#allocation4] sm:$0xff]
        %v673 = vld [vmem:[#allocation5] sm:$0xff]
        %v674 = vld [vmem:[#allocation6] sm:$0xff]
        %v675 = vld [vmem:[#allocation7] sm:$0xff]
        %v676 = vld [vmem:[#allocation2] sm:$0xff]
        %v678 = vsel %vm486, %v672, 0
        %680 = vmatprep.subr.mxu0 0.0
        %681 = vmatpush1.msra.mxu0 0.0
        %682 = vmatprep.subr.mxu0 0.0
        %683 = vmatpush1.msra.mxu0 0.0
        %684 = vmatprep.subr.mxu0 0.0
        %685 = vmatpush1.msra.mxu0 0.0
        %686 = vmatprep.subr.mxu0 0.0
        %687 = vmatpush1.msra.mxu0 0.0
        %688 = vmatprep.subr.mxu0 0.0
        %689 = vmatpush1.msra.mxu0 0.0
        %690 = vmatprep.subr.mxu0 0.0
        %691 = vmatpush1.msra.mxu0 0.0
        %692 = vmatprep.subr.mxu0 0.0
        %693 = vmatpush1.msra.mxu0 0.0
        %694 = vmatprep.subr.mxu0 0.0
        %695 = vmatpush1.msra.mxu0 0.0
        %696 = vmatprep.subr.mxu0 0.0
        %697 = vmatpush1.msra.mxu0 0.0
        %698 = vmatprep.subr.mxu0 0.0
        %699 = vmatpush1.msra.mxu0 0.0
        %700 = vmatprep.subr.mxu0 0.0
        %701 = vmatpush1.msra.mxu0 0.0
        %702 = vmatprep.subr.mxu0 0.0
        %703 = vmatpush1.msra.mxu0 0.0
        %704 = vmatprep.subr.mxu0 0.0
        %705 = vmatpush1.msra.mxu0 %v667
        %706 = vmatprep.subr.mxu0 0.0
        %707 = vmatpush1.msra.mxu0 %v666
        %708 = vmatprep.subr.mxu0 0.0
        %709 = vmatpush1.msra.mxu0 %v665
        %710 = vmatprep.subr.mxu0 0.0
        %711 = vmatpush1.msra.mxu0 %v664
        %712 = vmatprep.subr.mxu0 0.0
        %713 = vmatpush2.msra.mxu0 0.0
        %714 = vmatprep.subr.mxu0 0.0
        %715 = vmatpush2.msra.mxu0 0.0
        %716 = vmatprep.subr.mxu0 0.0
        %717 = vmatpush2.msra.mxu0 0.0
        %718 = vmatprep.subr.mxu0 0.0
        %719 = vmatpush2.msra.mxu0 0.0
        %720 = vmatprep.subr.mxu0 0.0
        %721 = vmatpush2.msra.mxu0 0.0
        %722 = vmatprep.subr.mxu0 0.0
        %723 = vmatpush2.msra.mxu0 0.0
        %724 = vmatprep.subr.mxu0 0.0
        %725 = vmatpush2.msra.mxu0 0.0
        %726 = vmatprep.subr.mxu0 0.0
        %727 = vmatpush2.msra.mxu0 0.0
        %728 = vmatprep.subr.mxu0 0.0
        %729 = vmatpush2.msra.mxu0 0.0
        %730 = vmatprep.subr.mxu0 0.0
        %731 = vmatpush2.msra.mxu0 0.0
        %732 = vmatprep.subr.mxu0 0.0
        %733 = vmatpush2.msra.mxu0 0.0
        %734 = vmatprep.subr.mxu0 0.0
        %735 = vmatpush2.msra.mxu0 0.0
        %736 = vmatprep.subr.mxu0 0.0
        %737 = vmatpush2.msra.mxu0 0.0
        %738 = vmatprep.subr.mxu0 0.0
        %739 = vmatpush2.msra.mxu0 0.0
        %740 = vmatprep.subr.mxu0 0.0
        %741 = vmatpush2.msra.mxu0 0.0
        %742 = vmatprep.subr.mxu0 0.0
        %743 = vmatpush2.msra.mxu0 0.0
        %744 = vmatprep.mubr.f32.mxu0 0.0
        %745 = vmatmul.mubr.f32.gmra.mxu0 %v678
        %v746 = vpop.f32.mrf.mxu0
        %v747 = vadd.f32 0.0, %v746
        %v748 = vpop.f32.mrf.mxu0
        %749 = vdwg.mxu0
        %v750 = vadd.f32 %v676, %v747
        %s751 = scalar_lea.vmem [#allocation3], 8
        %v752 = vld [vmem:[%s751] sm:$0xff]
        %v754 = vsel %vm486, %v674, 0
        %756 = vmatprep.subr.mxu0 0.0
        %757 = vmatpush1.msra.mxu0 0.0
        %758 = vmatprep.subr.mxu0 0.0
        %759 = vmatpush1.msra.mxu0 0.0
        %760 = vmatprep.subr.mxu0 0.0
        %761 = vmatpush1.msra.mxu0 0.0
        %762 = vmatprep.subr.mxu0 0.0
        %763 = vmatpush1.msra.mxu0 0.0
        %764 = vmatprep.subr.mxu0 0.0
        %765 = vmatpush1.msra.mxu0 0.0
        %766 = vmatprep.subr.mxu0 0.0
        %767 = vmatpush1.msra.mxu0 0.0
        %768 = vmatprep.subr.mxu0 0.0
        %769 = vmatpush1.msra.mxu0 0.0
        %770 = vmatprep.subr.mxu0 0.0
        %771 = vmatpush1.msra.mxu0 0.0
        %772 = vmatprep.subr.mxu0 0.0
        %773 = vmatpush1.msra.mxu0 0.0
        %774 = vmatprep.subr.mxu0 0.0
        %775 = vmatpush1.msra.mxu0 0.0
        %776 = vmatprep.subr.mxu0 0.0
        %777 = vmatpush1.msra.mxu0 0.0
        %778 = vmatprep.subr.mxu0 0.0
        %779 = vmatpush1.msra.mxu0 0.0
        %780 = vmatprep.subr.mxu0 0.0
        %781 = vmatpush1.msra.mxu0 %v671
        %782 = vmatprep.subr.mxu0 0.0
        %783 = vmatpush1.msra.mxu0 %v670
        %784 = vmatprep.subr.mxu0 0.0
        %785 = vmatpush1.msra.mxu0 %v669
        %786 = vmatprep.subr.mxu0 0.0
        %787 = vmatpush1.msra.mxu0 %v668
        %788 = vmatprep.subr.mxu0 0.0
        %789 = vmatpush2.msra.mxu0 0.0
        %790 = vmatprep.subr.mxu0 0.0
        %791 = vmatpush2.msra.mxu0 0.0
        %792 = vmatprep.subr.mxu0 0.0
        %793 = vmatpush2.msra.mxu0 0.0
        %794 = vmatprep.subr.mxu0 0.0
        %795 = vmatpush2.msra.mxu0 0.0
        %796 = vmatprep.subr.mxu0 0.0
        %797 = vmatpush2.msra.mxu0 0.0
        %798 = vmatprep.subr.mxu0 0.0
        %799 = vmatpush2.msra.mxu0 0.0
        %800 = vmatprep.subr.mxu0 0.0
        %801 = vmatpush2.msra.mxu0 0.0
        %802 = vmatprep.subr.mxu0 0.0
        %803 = vmatpush2.msra.mxu0 0.0
        %804 = vmatprep.subr.mxu0 0.0
        %805 = vmatpush2.msra.mxu0 0.0
        %806 = vmatprep.subr.mxu0 0.0
        %807 = vmatpush2.msra.mxu0 0.0
        %808 = vmatprep.subr.mxu0 0.0
        %809 = vmatpush2.msra.mxu0 0.0
        %810 = vmatprep.subr.mxu0 0.0
        %811 = vmatpush2.msra.mxu0 0.0
        %812 = vmatprep.subr.mxu0 0.0
        %813 = vmatpush2.msra.mxu0 0.0
        %814 = vmatprep.subr.mxu0 0.0
        %815 = vmatpush2.msra.mxu0 0.0
        %816 = vmatprep.subr.mxu0 0.0
        %817 = vmatpush2.msra.mxu0 0.0
        %818 = vmatprep.subr.mxu0 0.0
        %819 = vmatpush2.msra.mxu0 0.0
        %820 = vmatprep.mubr.f32.mxu0 0.0
        %821 = vmatmul.mubr.f32.gmra.mxu0 %v754
        %v822 = vpop.f32.mrf.mxu0
        %v823 = vadd.f32 0.0, %v822
        %v824 = vpop.f32.mrf.mxu0
        %825 = vdwg.mxu0
        %v826 = vadd.f32 %v752, %v823
        %v827 = vxor.u32 %v750, 2147483648
        %v828 = vmul.f32 %v827, 1.442695
        %v829 = vpow.pop %v828
        %v830 = vadd.f32 %v829, 1.0
        %v831 = vrcp.pop %v830
        %v832 = vmul.f32 1.0, %v831
        %v833 = vtanh.pop %v750
        %835 = vrot.lane.b32.xlu0 %v673, 32
        %v836 = vpop.permute.xlu0 %835
        %v838 = vmul.f32 %v832, %v836
        %840 = vrot.lane.b32.xlu0 %v833, 64
        %v841 = vpop.permute.xlu0 %840
        %v843 = vmul.f32 %v832, %v841
        %845 = vrot.lane.b32.xlu0 %v843, 32
        %v846 = vpop.permute.xlu0 %845
        %v848 = vadd.f32 %v838, %v846
        %v849 = vtanh.pop %v848
        %851 = vrot.lane.b32.xlu0 %v849, 64
        %v852 = vpop.permute.xlu0 %851
        %v854 = vmul.f32 %v832, %v852
        %v855 = vxor.u32 %v826, 2147483648
        %v856 = vmul.f32 %v855, 1.442695
        %v857 = vpow.pop %v856
        %v858 = vadd.f32 %v857, 1.0
        %v859 = vrcp.pop %v858
        %v860 = vmul.f32 1.0, %v859
        %v861 = vtanh.pop %v826
        %863 = vrot.lane.b32.xlu0 %v675, 32
        %v864 = vpop.permute.xlu0 %863
        %v866 = vmul.f32 %v860, %v864
        %868 = vrot.lane.b32.xlu0 %v861, 64
        %v869 = vpop.permute.xlu0 %868
        %v871 = vmul.f32 %v860, %v869
        %873 = vrot.lane.b32.xlu0 %v871, 32
        %v874 = vpop.permute.xlu0 %873
        %v876 = vadd.f32 %v866, %v874
        %v877 = vtanh.pop %v876
        %879 = vrot.lane.b32.xlu0 %v877, 64
        %v880 = vpop.permute.xlu0 %879
        %v882 = vmul.f32 %v860, %v880
        %884 = vrot.lane.b32.xlu0 %v854, 32
        %v885 = vpop.permute.xlu0 %884
        %887 = vst.msk [vmem:[%s452] sm:$0xff] %vm486, %v885
        %889 = vrot.lane.b32.xlu0 %v882, 32
        %v890 = vpop.permute.xlu0 %889
        %s892 = scalar_lea.vmem %s459, 8
        %893 = vst.msk [vmem:[%s892] sm:$0xff] %vm486, %v890
        %s894 = scalar_lea.vmem [#allocation2], 8
        %v895 = vld [vmem:[%s894] sm:$0xff]
        %v896 = vsel %vm486, %v885, 0
        %898 = vmatprep.subr.mxu0 0.0
        %899 = vmatpush1.msra.mxu0 0.0
        %900 = vmatprep.subr.mxu0 0.0
        %901 = vmatpush1.msra.mxu0 0.0
        %902 = vmatprep.subr.mxu0 0.0
        %903 = vmatpush1.msra.mxu0 0.0
        %904 = vmatprep.subr.mxu0 0.0
        %905 = vmatpush1.msra.mxu0 0.0
        %906 = vmatprep.subr.mxu0 0.0
        %907 = vmatpush1.msra.mxu0 0.0
        %908 = vmatprep.subr.mxu0 0.0
        %909 = vmatpush1.msra.mxu0 0.0
        %910 = vmatprep.subr.mxu0 0.0
        %911 = vmatpush1.msra.mxu0 0.0
        %912 = vmatprep.subr.mxu0 0.0
        %913 = vmatpush1.msra.mxu0 0.0
        %914 = vmatprep.subr.mxu0 0.0
        %915 = vmatpush1.msra.mxu0 0.0
        %916 = vmatprep.subr.mxu0 0.0
        %917 = vmatpush1.msra.mxu0 0.0
        %918 = vmatprep.subr.mxu0 0.0
        %919 = vmatpush1.msra.mxu0 0.0
        %920 = vmatprep.subr.mxu0 0.0
        %921 = vmatpush1.msra.mxu0 0.0
        %922 = vmatprep.subr.mxu0 0.0
        %923 = vmatpush1.msra.mxu0 %v667
        %924 = vmatprep.subr.mxu0 0.0
        %925 = vmatpush1.msra.mxu0 %v666
        %926 = vmatprep.subr.mxu0 0.0
        %927 = vmatpush1.msra.mxu0 %v665
        %928 = vmatprep.subr.mxu0 0.0
        %929 = vmatpush1.msra.mxu0 %v664
        %930 = vmatprep.subr.mxu0 0.0
        %931 = vmatpush2.msra.mxu0 0.0
        %932 = vmatprep.subr.mxu0 0.0
        %933 = vmatpush2.msra.mxu0 0.0
        %934 = vmatprep.subr.mxu0 0.0
        %935 = vmatpush2.msra.mxu0 0.0
        %936 = vmatprep.subr.mxu0 0.0
        %937 = vmatpush2.msra.mxu0 0.0
        %938 = vmatprep.subr.mxu0 0.0
        %939 = vmatpush2.msra.mxu0 0.0
        %940 = vmatprep.subr.mxu0 0.0
        %941 = vmatpush2.msra.mxu0 0.0
        %942 = vmatprep.subr.mxu0 0.0
        %943 = vmatpush2.msra.mxu0 0.0
        %944 = vmatprep.subr.mxu0 0.0
        %945 = vmatpush2.msra.mxu0 0.0
        %946 = vmatprep.subr.mxu0 0.0
        %947 = vmatpush2.msra.mxu0 0.0
        %948 = vmatprep.subr.mxu0 0.0
        %949 = vmatpush2.msra.mxu0 0.0
        %950 = vmatprep.subr.mxu0 0.0
        %951 = vmatpush2.msra.mxu0 0.0
        %952 = vmatprep.subr.mxu0 0.0
        %953 = vmatpush2.msra.mxu0 0.0
        %954 = vmatprep.subr.mxu0 0.0
        %955 = vmatpush2.msra.mxu0 0.0
        %956 = vmatprep.subr.mxu0 0.0
        %957 = vmatpush2.msra.mxu0 0.0
        %958 = vmatprep.subr.mxu0 0.0
        %959 = vmatpush2.msra.mxu0 0.0
        %960 = vmatprep.subr.mxu0 0.0
        %961 = vmatpush2.msra.mxu0 0.0
        %962 = vmatprep.mubr.f32.mxu0 0.0
        %963 = vmatmul.mubr.f32.gmra.mxu0 %v896
        %v964 = vpop.f32.mrf.mxu0
        %v965 = vadd.f32 0.0, %v964
        %v966 = vpop.f32.mrf.mxu0
        %967 = vdwg.mxu0
        %v968 = vadd.f32 %v895, %v965
        %v969 = vld [vmem:[#allocation3] sm:$0xff]
        %v970 = vsel %vm486, %v890, 0
        %972 = vmatprep.subr.mxu0 0.0
        %973 = vmatpush1.msra.mxu0 0.0
        %974 = vmatprep.subr.mxu0 0.0
        %975 = vmatpush1.msra.mxu0 0.0
        %976 = vmatprep.subr.mxu0 0.0
        %977 = vmatpush1.msra.mxu0 0.0
        %978 = vmatprep.subr.mxu0 0.0
        %979 = vmatpush1.msra.mxu0 0.0
        %980 = vmatprep.subr.mxu0 0.0
        %981 = vmatpush1.msra.mxu0 0.0
        %982 = vmatprep.subr.mxu0 0.0
        %983 = vmatpush1.msra.mxu0 0.0
        %984 = vmatprep.subr.mxu0 0.0
        %985 = vmatpush1.msra.mxu0 0.0
        %986 = vmatprep.subr.mxu0 0.0
        %987 = vmatpush1.msra.mxu0 0.0
        %988 = vmatprep.subr.mxu0 0.0
        %989 = vmatpush1.msra.mxu0 0.0
        %990 = vmatprep.subr.mxu0 0.0
        %991 = vmatpush1.msra.mxu0 0.0
        %992 = vmatprep.subr.mxu0 0.0
        %993 = vmatpush1.msra.mxu0 0.0
        %994 = vmatprep.subr.mxu0 0.0
        %995 = vmatpush1.msra.mxu0 0.0
        %996 = vmatprep.subr.mxu0 0.0
        %997 = vmatpush1.msra.mxu0 %v671
        %998 = vmatprep.subr.mxu0 0.0
        %999 = vmatpush1.msra.mxu0 %v670
        %1000 = vmatprep.subr.mxu0 0.0
        %1001 = vmatpush1.msra.mxu0 %v669
        %1002 = vmatprep.subr.mxu0 0.0
        %1003 = vmatpush1.msra.mxu0 %v668
        %1004 = vmatprep.subr.mxu0 0.0
        %1005 = vmatpush2.msra.mxu0 0.0
        %1006 = vmatprep.subr.mxu0 0.0
        %1007 = vmatpush2.msra.mxu0 0.0
        %1008 = vmatprep.subr.mxu0 0.0
        %1009 = vmatpush2.msra.mxu0 0.0
        %1010 = vmatprep.subr.mxu0 0.0
        %1011 = vmatpush2.msra.mxu0 0.0
        %1012 = vmatprep.subr.mxu0 0.0
        %1013 = vmatpush2.msra.mxu0 0.0
        %1014 = vmatprep.subr.mxu0 0.0
        %1015 = vmatpush2.msra.mxu0 0.0
        %1016 = vmatprep.subr.mxu0 0.0
        %1017 = vmatpush2.msra.mxu0 0.0
        %1018 = vmatprep.subr.mxu0 0.0
        %1019 = vmatpush2.msra.mxu0 0.0
        %1020 = vmatprep.subr.mxu0 0.0
        %1021 = vmatpush2.msra.mxu0 0.0
        %1022 = vmatprep.subr.mxu0 0.0
        %1023 = vmatpush2.msra.mxu0 0.0
        %1024 = vmatprep.subr.mxu0 0.0
        %1025 = vmatpush2.msra.mxu0 0.0
        %1026 = vmatprep.subr.mxu0 0.0
        %1027 = vmatpush2.msra.mxu0 0.0
        %1028 = vmatprep.subr.mxu0 0.0
        %1029 = vmatpush2.msra.mxu0 0.0
        %1030 = vmatprep.subr.mxu0 0.0
        %1031 = vmatpush2.msra.mxu0 0.0
        %1032 = vmatprep.subr.mxu0 0.0
        %1033 = vmatpush2.msra.mxu0 0.0
        %1034 = vmatprep.subr.mxu0 0.0
        %1035 = vmatpush2.msra.mxu0 0.0
        %1036 = vmatprep.mubr.f32.mxu0 0.0
        %1037 = vmatmul.mubr.f32.gmra.mxu0 %v970
        %v1038 = vpop.f32.mrf.mxu0
        %v1039 = vadd.f32 0.0, %v1038
        %v1040 = vpop.f32.mrf.mxu0
        %1041 = vdwg.mxu0
        %v1042 = vadd.f32 %v969, %v1039
        %v1043 = vxor.u32 %v968, 2147483648
        %v1044 = vmul.f32 %v1043, 1.442695
        %v1045 = vpow.pop %v1044
        %v1046 = vadd.f32 %v1045, 1.0
        %v1047 = vrcp.pop %v1046
        %v1048 = vmul.f32 1.0, %v1047
        %v1049 = vtanh.pop %v968
        %v1050 = vmul.f32 %v1048, %v848
        %1052 = vrot.lane.b32.xlu0 %v1049, 64
        %v1053 = vpop.permute.xlu0 %1052
        %v1055 = vmul.f32 %v1048, %v1053
        %1057 = vrot.lane.b32.xlu0 %v1055, 32
        %v1058 = vpop.permute.xlu0 %1057
        %v1060 = vadd.f32 %v1050, %v1058
        %v1061 = vtanh.pop %v1060
        %1063 = vrot.lane.b32.xlu0 %v1061, 64
        %v1064 = vpop.permute.xlu0 %1063
        %v1066 = vmul.f32 %v1048, %v1064
        %v1067 = vxor.u32 %v1042, 2147483648
        %v1068 = vmul.f32 %v1067, 1.442695
        %v1069 = vpow.pop %v1068
        %v1070 = vadd.f32 %v1069, 1.0
        %v1071 = vrcp.pop %v1070
        %v1072 = vmul.f32 1.0, %v1071
        %v1073 = vtanh.pop %v1042
        %v1074 = vmul.f32 %v1072, %v876
        %1076 = vrot.lane.b32.xlu0 %v1073, 64
        %v1077 = vpop.permute.xlu0 %1076
        %v1079 = vmul.f32 %v1072, %v1077
        %1081 = vrot.lane.b32.xlu0 %v1079, 32
        %v1082 = vpop.permute.xlu0 %1081
        %v1084 = vadd.f32 %v1074, %v1082
        %v1085 = vtanh.pop %v1084
        %1087 = vrot.lane.b32.xlu0 %v1085, 64
        %v1088 = vpop.permute.xlu0 %1087
        %v1090 = vmul.f32 %v1072, %v1088
        %1092 = vrot.lane.b32.xlu0 %v1066, 32
        %v1093 = vpop.permute.xlu0 %1092
        %s1095 = scalar_lea.vmem %s452, 8
        %1096 = vst.msk [vmem:[%s1095] sm:$0xff] %vm486, %v1093
        %1098 = vrot.lane.b32.xlu0 %v1090, 32
        %v1099 = vpop.permute.xlu0 %1098
        %1101 = vst.msk [vmem:[%s459] sm:$0xff] %vm486, %v1099
        %1102 = vst.msk [vmem:[#allocation4] sm:$0xff] %vm486, %v1093
        %1104 = vrot.lane.b32.xlu0 %v1060, 96
        %v1105 = vpop.permute.xlu0 %1104
        %1107 = vst.msk [vmem:[#allocation5] sm:$0xff] %vm486, %v1105
        %1108 = vst.msk [vmem:[#allocation6] sm:$0xff] %vm486, %v1099
        %1110 = vrot.lane.b32.xlu0 %v1084, 96
        %v1111 = vpop.permute.xlu0 %1110
        %1113 = vst.msk [vmem:[#allocation7] sm:$0xff] %vm486, %v1111
        %1114 = vst.msk [vmem:[%s10] sm:$0xff] %vm486, %v1093
        %s1115 = scalar_lea.vmem %s10, 8
        %1116 = vst.msk [vmem:[%s1115] sm:$0xff] %vm486, %v1099
        %1117 = vst.msk [vmem:[%s11] sm:$0xff] %vm486, %v1105
        %s1118 = scalar_lea.vmem %s11, 8
        %1119 = vst.msk [vmem:[%s1118] sm:$0xff] %vm486, %v1111
        %s1120 = smul.u32 2, %s25
        %p1121 = scmp.lt.s32.totalorder %s1120, 3
        %s1122 = scalar_select %p1121, %s1120, 3
        %s1123 = smul.addr %s1122, 8
        %s1124 = scalar_lea.vmem %s8, %s1123
        %s1125 = ssub.s32 1, %s25
        %s1126 = smul.u32 2, %s1125
        %p1127 = scmp.lt.s32.totalorder %s1126, 3
        %s1128 = scalar_select %p1127, %s1126, 3
        %s1129 = smul.addr %s1128, 8
        %s1130 = scalar_lea.vmem %s9, %s1129
        // Predicated region
        $region65: #{pblstm_forward.1} parent=51 // pred_check
          %p1131 = pneg %p223
        $region66: #{pblstm_forward.1} parent=51 // pred_check_branch
          %1133 = sbr.rel (%p1131) target = $region68
        $region67: #{pblstm_forward.1} parent=51 // pred_region
          %s1134 = smul.u32 2, %s25
        $region68: #{pblstm_forward.1} parent=51 // pred_fallthru
          _
        // Predicated region
        $region69: #{pblstm_forward.1} parent=51 // pred_check
          %p1135 = pneg %p251
        $region70: #{pblstm_forward.1} parent=51 // pred_check_branch
          %1137 = sbr.rel (%p1135) target = $region72
        $region71: #{pblstm_forward.1} parent=51 // pred_region
          %s1138 = ssub.s32 1, %s25
          %s1139 = smul.u32 2, %s1138
        $region72: #{pblstm_forward.1} parent=51 // pred_fallthru
          _
        // Predicated region
        $region73: #{pblstm_forward.1} parent=51 // pred_check
          %p1140 = pneg %p272
        $region74: #{pblstm_forward.1} parent=51 // pred_check_branch
          %1142 = sbr.rel (%p1140) target = $region76
        $region75: #{pblstm_forward.1} parent=51 // pred_region
          _
        $region76: #{pblstm_forward.1} parent=51 // pred_fallthru
          _
        // Predicated region
        $region77: #{pblstm_forward.1} parent=51 // pred_check
          %p1143 = pneg %p293
        $region78: #{pblstm_forward.1} parent=51 // pred_check_branch
          %1145 = sbr.rel (%p1143) target = $region80
        $region79: #{pblstm_forward.1} parent=51 // pred_region
          _
        $region80: #{pblstm_forward.1} parent=51 // pred_fallthru
          _
        // Predicated region
        $region81: #{pblstm_forward.1} parent=51 // pred_check
          %p1146 = pneg %p272
        $region82: #{pblstm_forward.1} parent=51 // pred_check_branch
          %1148 = sbr.rel (%p1146) target = $region84
        $region83: #{pblstm_forward.1} parent=51 // pred_region
          _
        $region84: #{pblstm_forward.1} parent=51 // pred_fallthru
          _
        // Predicated region
        $region85: #{pblstm_forward.1} parent=51 // pred_check
          %p1149 = pneg %p293
        $region86: #{pblstm_forward.1} parent=51 // pred_check_branch
          %1151 = sbr.rel (%p1149) target = $region88
        $region87: #{pblstm_forward.1} parent=51 // pred_region
          _
        $region88: #{pblstm_forward.1} parent=51 // pred_fallthru
          _
      $region52: #{pblstm_forward.1} parent=5 // pred_fallthru
        _
      %p1152 = scmp.le.s32.totalorder 2, %s20
      // Predicated region
      $region89: #{pblstm_forward.1} parent=5 // pred_check
        %p1153 = pneg %p1152
      $region90: #{pblstm_forward.1} parent=5 // pred_check_branch
        %1155 = sbr.rel (%p1153) target = $region92
      $region91: #{pblstm_forward.1} parent=5 // pred_region
        %s1156 = ssub.s32 %s20, 2
        // Predicated region
        $region93: #{pblstm_forward.1} parent=91 // pred_check
          %p1157 = pneg %p229
        $region94: #{pblstm_forward.1} parent=91 // pred_check_branch
          %1159 = sbr.rel (%p1157) target = $region96
        $region95: #{pblstm_forward.1} parent=91 // pred_region
          %s1160 = smul.u32 2, %s26
          %p1161 = scmp.lt.s32.totalorder %s1160, 3
          %s1162 = scalar_select %p1161, %s1160, 3
          %s1163 = smul.addr %s1162, 8
          %s1164 = scalar_lea.vmem %s8, %s1163
        $region96: #{pblstm_forward.1} parent=91 // pred_fallthru
          _
        // Predicated region
        $region97: #{pblstm_forward.1} parent=91 // pred_check
          %p1165 = pneg %p257
        $region98: #{pblstm_forward.1} parent=91 // pred_check_branch
          %1167 = sbr.rel (%p1165) target = $region100
        $region99: #{pblstm_forward.1} parent=91 // pred_region
          %s1168 = ssub.s32 1, %s26
          %s1169 = smul.u32 2, %s1168
          %p1170 = scmp.lt.s32.totalorder %s1169, 3
          %s1171 = scalar_select %p1170, %s1169, 3
          %s1172 = smul.addr %s1171, 8
          %s1173 = scalar_lea.vmem %s9, %s1172
        $region100: #{pblstm_forward.1} parent=91 // pred_fallthru
          _
      $region92: #{pblstm_forward.1} parent=5 // pred_fallthru
        _
    $region6: #{pblstm_forward.1} parent=1 // loop_footer
      %s24 = sadd.s32 1, %s20
    $region7: #{pblstm_forward.1} parent=1 // loop_footer_branch
      %19 = sbr.rel target = $region3
    $region8: #{pblstm_forward.1} parent=1 // loop_exit
      _
    %1174 = vsyncpa [#allocation9], 1
    %s1175 = scalar_lea.sflag [#allocation9], 1
    %1176 = vsyncpa %s1175, 1
    %1177 = vsyncpa [#allocation11], 1

</llo_original>
